<compile_context>
chip_gen: v7x
topology: tpu7x:2x2x1
jax: 0.10.0
libtpu: 0.0.40
codegen_flags: <defaults>
</compile_context>

<pallas_src>
import math
import numpy as np

import jax
import jax.numpy as jnp
from jax import lax
from jax.experimental import pallas as pl
from jax.experimental.pallas import tpu as pltpu

# ---------------------------------------------------------------------------
# Module hyper-parameters (from AttentionBlock.__init__)
# ---------------------------------------------------------------------------
CHANNELS = 64
LABEL_DIM = 128
NUM_GROUPS = 8
GROUP_SIZE = CHANNELS // NUM_GROUPS
NUM_HEADS = 4
HEAD_DIM = CHANNELS // NUM_HEADS
EPS = 1e-5


# ---------------------------------------------------------------------------
# Pallas kernel: fused GroupNorm + multi-head self-attention + residual,
# operating on (Bblk, C, S) blocks in the NCHW-derived layout.
# ---------------------------------------------------------------------------
def _self_attn_kernel(x_ref, wqkv_ref, wo_ref, bqkv_ref, bo_ref, out_ref):
    C = CHANNELS
    hd = HEAD_DIM
    bblk, _, S = x_ref.shape
    inv_n = 1.0 / float(GROUP_SIZE * S)

    wqkv = wqkv_ref[...]                     # (3C, C) bf16 (gamma + 1/sqrt(hd) folded)
    wo = wo_ref[...]                         # (C, C)  bf16
    bqkv = bqkv_ref[...]                     # (3C, 1) f32  (beta folded, q-scaled)
    bo = bo_ref[...]                         # (C, 1)  f32

    # bf16 identity: the only orientation flip (Q: (C,S)->(S,C)) runs on the MXU,
    # which is idle-ish here (the kernel is EUP/overhead bound).
    # TODO(synk): replace with an in-kernel transpose once relied upon shapes are
    # known to lower cleanly; the identity matmul is negligible work either way.
    eye = (lax.broadcasted_iota(jnp.int32, (S, S), 0)
           == lax.broadcasted_iota(jnp.int32, (S, S), 1)).astype(jnp.bfloat16)

    for bb in range(bblk):                   # static unroll; bblk kept small
        x = x_ref[bb]                        # (C, S) f32

        # ---- GroupNorm statistics in f32 on VPU/XLU (contiguous channel groups) --
        xg = x.reshape(NUM_GROUPS, GROUP_SIZE, S)
        mean = jnp.sum(jnp.sum(xg, axis=-1, keepdims=True),
                       axis=-2, keepdims=True) * inv_n                      # (G,1,1)
        d = xg - mean
        var = jnp.sum(jnp.sum(d * d, axis=-1, keepdims=True),
                      axis=-2, keepdims=True) * inv_n                       # biased
        xn = (d * lax.rsqrt(var + EPS)).reshape(C, S)                       # (C, S)

        # ---- Fused QKV projection (affine + score scale pre-folded in wrapper) ---
        qkv = jnp.dot(wqkv, xn.astype(jnp.bfloat16),
                      preferred_element_type=jnp.float32) + bqkv            # (3C, S)

        # Q flipped to (S, C) via the identity matmul (validated dim1/dim1 pattern).
        q_sc = lax.dot_general(eye, qkv[0:C].astype(jnp.bfloat16),
                               (((1,), (1,)), ((), ())),
                               preferred_element_type=jnp.float32)          # (S, C)

        acc = x + bo                                                        # residual + out-bias
        # TODO(synk): for S >= ~1k switch to a KV-tiled online-softmax (flash-style)
        # loop so only one (tile_q, tile_k) score buffer is live (v7x: 64 MiB VMEM).
        for h in range(NUM_HEADS):
            lo = h * hd
            qh = q_sc[:, lo:lo + hd].astype(jnp.bfloat16)                   # (S, hd)
            kh = qkv[C + lo:C + lo + hd, :].astype(jnp.bfloat16)            # (hd, S)
            vh = qkv[2 * C + lo:2 * C + lo + hd, :].astype(jnp.bfloat16)    # (hd, S)

            s = jnp.dot(qh, kh, preferred_element_type=jnp.float32)         # (S, S)
            s = s - jnp.max(s, axis=-1, keepdims=True)
            p = jnp.exp(s)
            p = (p * pl.reciprocal(jnp.sum(p, axis=-1, keepdims=True),
                                   approx=True)).astype(jnp.bfloat16)       # cast once
            head = lax.dot_general(vh, p, (((1,), (1,)), ((), ())),
                                   preferred_element_type=jnp.float32)      # (hd, S)
            acc = acc + jnp.dot(wo[:, lo:lo + hd], head.astype(jnp.bfloat16),
                                preferred_element_type=jnp.float32)         # (C, S)
        out_ref[bb] = acc.astype(out_ref.dtype)


# ---------------------------------------------------------------------------
# Wrapper-side parameter packing / sizing helpers
# ---------------------------------------------------------------------------
def _pack_self_attn_params(params):
    """Fold GroupNorm affine + 1/sqrt(hd) into the (C,S)-layout projections."""
    C = CHANNELS
    scale = 1.0 / math.sqrt(HEAD_DIM)
    gamma = params["gn_x_gamma"].astype(jnp.float32)
    beta = params["gn_x_beta"].astype(jnp.float32)
    wqkv = params["in_proj_w"].astype(jnp.float32)          # (3C, C), rows = [q; k; v]
    bqkv = params["in_proj_b"].astype(jnp.float32)          # (3C,)
    # qkv_cs = W @ (gamma*xn + beta) + b = (W*gamma[None,:]) @ xn + (W@beta + b)
    bqkv = wqkv @ beta + bqkv
    wqkv = wqkv * gamma[None, :]
    # fold the 1/sqrt(head_dim) score scale into the Q rows.
    row_scale = jnp.concatenate([jnp.full((C,), scale, jnp.float32),
                                 jnp.ones((2 * C,), jnp.float32)])
    wqkv = wqkv * row_scale[:, None]
    bqkv = bqkv * row_scale
    wo = params["out_proj_w"].astype(jnp.float32)           # (C, C): out_cs = Wo @ heads + bo
    bo = params["out_proj_b"].astype(jnp.float32)
    return (wqkv.astype(jnp.bfloat16), wo.astype(jnp.bfloat16),
            bqkv[:, None], bo[:, None])


def _choose_batch_block(B, S):
    """Batch elements per grid step: amortize per-step overhead, respect VMEM."""
    C = CHANNELS
    per_elem = (4 * C * S + 6 * C * S + 3 * S * S) * 4 + 2 * S * S
    cap = max(1, (24 * 1024 * 1024) // per_elem)
    # keep >=2 grid steps when B allows it (both v7x TensorCores stay busy);
    # cap the static unroll to bound compile time.
    target = B // 2 if (B % 2 == 0 and B >= 2) else B
    bblk = max(1, min(target, cap, 8))
    while B % bblk:
        bblk -= 1
    return bblk


def _self_attn_vmem_bytes(bblk, S):
    C = CHANNELS
    io = 2 * 2 * bblk * C * S * 4                         # in + out blocks, double-buffered
    weights = 2 * ((4 * C * C) * 2 + 4 * C * 128 * 4)     # bf16 weights + padded f32 biases
    interm = (6 * C * S) * 4 + 3 * S * S * 4 + 2 * S * S  # qkv/xn/acc + scores/p + eye
    return io + weights + interm


def _label_hidden(y, params):
    """group_norm_y + label_proj on the label vector -> (B, C) (tiny plain-JAX glue)."""
    B = y.shape[0]
    if y.ndim == 2:
        y2 = y
    elif y.ndim == 4:
        if y.shape[2] != 1 or y.shape[3] != 1:
            raise ValueError(
                f"4-D y must have 1x1 spatial extent to reshape to (B, {LABEL_DIM}); got {y.shape}")
        y2 = y.reshape(B, LABEL_DIM)
    else:
        raise ValueError(f"Expected y to have 2 or 4 dimensions, but got {y.ndim}")
    yg = y2.reshape(B, NUM_GROUPS, LABEL_DIM // NUM_GROUPS)
    mean = yg.mean(-1, keepdims=True)
    var = yg.var(-1, keepdims=True)          # biased, like torch GroupNorm
    yn = ((yg - mean) / jnp.sqrt(var + EPS)).reshape(B, LABEL_DIM)
    yn = yn * params["gn_y_gamma"][None, :] + params["gn_y_beta"][None, :]
    return yn @ params["label_proj_w"].T + params["label_proj_b"][None, :]


# ---------------------------------------------------------------------------
# Forward
# ---------------------------------------------------------------------------
@jax.jit
def attention_block_forward(x, params, y=None):
    B, C, H, W = x.shape
    assert C == CHANNELS
    S = H * W
    x = x.astype(jnp.float32)

    if y is None:
        x_cs = x.reshape(B, C, S)                            # NCHW-native token layout, no transpose
        wqkv, wo, bqkv, bo = _pack_self_attn_params(params)
        bblk = _choose_batch_block(B, S)
        ckw = dict(dimension_semantics=("parallel",))
        est = _self_attn_vmem_bytes(bblk, S)
        if est > 32 * 1024 * 1024:
            ckw["vmem_limit_bytes"] = int(min(est, 56 * 1024 * 1024))
        out_cs = pl.pallas_call(
            _self_attn_kernel,
            out_shape=jax.ShapeDtypeStruct((B, C, S), jnp.float32),
            grid=(B // bblk,),
            in_specs=[pl.BlockSpec((bblk, C, S), lambda b: (b, 0, 0)),
                      pl.BlockSpec((3 * C, C), lambda b: (0, 0)),
                      pl.BlockSpec((C, C), lambda b: (0, 0)),
                      pl.BlockSpec((3 * C, 1), lambda b: (0, 0)),
                      pl.BlockSpec((C, 1), lambda b: (0, 0))],
            out_specs=pl.BlockSpec((bblk, C, S), lambda b: (b, 0, 0)),
            input_output_aliases={0: 0},                     # x buffer is dead after the kernel
            compiler_params=pltpu.CompilerParams(**ckw),
        )(x_cs, wqkv, wo, bqkv, bo)
        return out_cs.reshape(B, C, H, W)

    # ---- label-conditioned cross-attention: one key/value token => softmax == 1,
    # so the attention output is Wo @ (Wv h_y + bv) + bo broadcast over all tokens.
    # Residual broadcast-add stays in NCHW and is left to XLA (HBM roofline, no passes).
    hy = _label_hidden(y.astype(jnp.float32), params)                      # (B, C)
    wv = params["in_proj_w"][2 * C:3 * C].astype(jnp.float32)
    bv = params["in_proj_b"][2 * C:3 * C].astype(jnp.float32)
    v = hy @ wv.T + bv[None, :]
    add = (v @ params["out_proj_w"].astype(jnp.float32).T
           + params["out_proj_b"].astype(jnp.float32)[None, :])            # (B, C)
    return x + add[:, :, None, None]


# ---------------------------------------------------------------------------
# Deterministic parameter init (shapes from AttentionBlock.__init__)
# ---------------------------------------------------------------------------
def init_params(key):
    ks = jax.random.split(key, 10)
    f32 = jnp.float32
    return {
        "gn_x_gamma": 1.0 + 0.1 * jax.random.normal(ks[0], (CHANNELS,), f32),
        "gn_x_beta": 0.1 * jax.random.normal(ks[1], (CHANNELS,), f32),
        "gn_y_gamma": 1.0 + 0.1 * jax.random.normal(ks[2], (LABEL_DIM,), f32),
        "gn_y_beta": 0.1 * jax.random.normal(ks[3], (LABEL_DIM,), f32),
        "label_proj_w": 0.05 * jax.random.normal(ks[4], (CHANNELS, LABEL_DIM), f32),
        "label_proj_b": 0.05 * jax.random.normal(ks[5], (CHANNELS,), f32),
        "in_proj_w": 0.05 * jax.random.normal(ks[6], (3 * CHANNELS, CHANNELS), f32),
        "in_proj_b": 0.05 * jax.random.normal(ks[7], (3 * CHANNELS,), f32),
        "out_proj_w": 0.05 * jax.random.normal(ks[8], (CHANNELS, CHANNELS), f32),
        "out_proj_b": 0.05 * jax.random.normal(ks[9], (CHANNELS,), f32),
    }


# ---------------------------------------------------------------------------
# Pure-JAX reference (mirrors the PyTorch forward, full MHA in both paths)
# ---------------------------------------------------------------------------
def reference_forward(x, params, y=None):
    B, C, H, W = x.shape
    S = H * W
    xg = x.reshape(B, NUM_GROUPS, -1)
    mean = xg.mean(-1, keepdims=True)
    var = xg.var(-1, keepdims=True)
    hx = ((xg - mean) / jnp.sqrt(var + EPS)).reshape(B, C, H, W)
    hx = hx * params["gn_x_gamma"].reshape(1, C, 1, 1) + params["gn_x_beta"].reshape(1, C, 1, 1)
    hx = hx.reshape(B, C, S).transpose(0, 2, 1)                            # (B, S, C)

    kv = hx if y is None else _label_hidden(y, params)[:, None, :]

    wq = params["in_proj_w"][0 * C:1 * C]
    wk = params["in_proj_w"][1 * C:2 * C]
    wv = params["in_proj_w"][2 * C:3 * C]
    bq = params["in_proj_b"][0 * C:1 * C]
    bk = params["in_proj_b"][1 * C:2 * C]
    bv = params["in_proj_b"][2 * C:3 * C]

    q = hx @ wq.T + bq
    k = kv @ wk.T + bk
    v = kv @ wv.T + bv
    hd = C // NUM_HEADS
    Sk = kv.shape[1]
    q = q.reshape(B, S, NUM_HEADS, hd).transpose(0, 2, 1, 3)
    k = k.reshape(B, Sk, NUM_HEADS, hd).transpose(0, 2, 1, 3)
    v = v.reshape(B, Sk, NUM_HEADS, hd).transpose(0, 2, 1, 3)
    scores = jnp.einsum("bhqd,bhkd->bhqk", q, k) / math.sqrt(hd)
    p = jax.nn.softmax(scores, axis=-1)
    o = jnp.einsum("bhqk,bhkd->bhqd", p, v)
    o = o.transpose(0, 2, 1, 3).reshape(B, S, C)
    o = o @ params["out_proj_w"].T + params["out_proj_b"]
    return x + o.transpose(0, 2, 1).reshape(B, C, H, W)


if __name__ == "__main__":
    key = jax.random.PRNGKey(0)
    kx, ky, kp = jax.random.split(key, 3)
    B, H, W = 2, 8, 8
    x = jax.random.normal(kx, (B, CHANNELS, H, W), jnp.float32)
    y = jax.random.normal(ky, (B, LABEL_DIM), jnp.float32)
    params = init_params(kp)

    # self-attention path (y=None)
    out_self = jax.block_until_ready(attention_block_forward(x, params, None))
    ref_self = reference_forward(x, params, None)
    np.testing.assert_allclose(np.asarray(out_self), np.asarray(ref_self),
                               rtol=1e-2, atol=1e-2)

    # label-conditioned cross-attention path
    out_cross = jax.block_until_ready(attention_block_forward(x, params, y))
    ref_cross = reference_forward(x, params, y)
    np.testing.assert_allclose(np.asarray(out_cross), np.asarray(ref_cross),
                               rtol=1e-2, atol=1e-2)

    print("KERNEL_OK")
</pallas_src>

<mosaic_0001>
module attributes {stable_mosaic.version = 11 : i64} {
  func.func @_self_attn_kernel(%arg0: i32, %arg1: memref<1x64x64xf32, #tpu.memory_space<vmem>>, %arg2: memref<192x64xbf16, #tpu.memory_space<vmem>>, %arg3: memref<64x64xbf16, #tpu.memory_space<vmem>>, %arg4: memref<192x1xf32, #tpu.memory_space<vmem>>, %arg5: memref<64x1xf32, #tpu.memory_space<vmem>>, %arg6: memref<1x64x64xf32, #tpu.memory_space<vmem>>) attributes {dimension_semantics = [#tpu.dimension_semantics<parallel>], iteration_bounds = array<i64: 2>, scalar_prefetch = 0 : i64, scratch_operands = 0 : i64, tpu.core_type = #tpu.core_type<tc>, window_params = [{transform_indices = @transform_0, window_bounds = array<i64: 1, 64, 64>}, {pipeline_mode = #tpu.pipeline_mode<synchronous>, transform_indices = @transform_1, window_bounds = array<i64: 192, 64>}, {pipeline_mode = #tpu.pipeline_mode<synchronous>, transform_indices = @transform_2, window_bounds = array<i64: 64, 64>}, {pipeline_mode = #tpu.pipeline_mode<synchronous>, transform_indices = @transform_3, window_bounds = array<i64: 192, 1>}, {pipeline_mode = #tpu.pipeline_mode<synchronous>, transform_indices = @transform_4, window_bounds = array<i64: 64, 1>}, {transform_indices = @transform_5, window_bounds = array<i64: 1, 64, 64>}]} {
    %c0 = arith.constant 0 : index
    %c0_0 = arith.constant 0 : index
    %0 = vector.load %arg2[%c0, %c0_0] : memref<192x64xbf16, #tpu.memory_space<vmem>>, vector<192x64xbf16>
    %c0_1 = arith.constant 0 : index
    %c0_2 = arith.constant 0 : index
    %1 = vector.load %arg3[%c0_1, %c0_2] : memref<64x64xbf16, #tpu.memory_space<vmem>>, vector<64x64xbf16>
    %c0_3 = arith.constant 0 : index
    %c0_4 = arith.constant 0 : index
    %2 = vector.load %arg4[%c0_3, %c0_4] : memref<192x1xf32, #tpu.memory_space<vmem>>, vector<192x1xf32>
    %c0_5 = arith.constant 0 : index
    %c0_6 = arith.constant 0 : index
    %3 = vector.load %arg5[%c0_5, %c0_6] : memref<64x1xf32, #tpu.memory_space<vmem>>, vector<64x1xf32>
    %4 = tpu.iota {dimensions = array<i32: 0>} : vector<64x64xi32>
    %5 = tpu.iota {dimensions = array<i32: 1>} : vector<64x64xi32>
    %6 = arith.cmpi eq, %4, %5 : vector<64x64xi32>
    %7 = arith.extui %6 : vector<64x64xi1> to vector<64x64xi32>
    %8 = arith.sitofp %7 : vector<64x64xi32> to vector<64x64xf32>
    %9 = arith.truncf %8 : vector<64x64xf32> to vector<64x64xbf16>
    %c0_7 = arith.constant 0 : index
    %c0_8 = arith.constant 0 : index
    %c0_9 = arith.constant 0 : index
    %10 = vector.load %arg1[%c0_7, %c0_8, %c0_9] : memref<1x64x64xf32, #tpu.memory_space<vmem>>, vector<1x64x64xf32>
    %11 = vector.shape_cast %10 : vector<1x64x64xf32> to vector<64x64xf32>
    %12 = vector.shape_cast %11 : vector<64x64xf32> to vector<8x8x64xf32>
    %cst = arith.constant dense<0.000000e+00> : vector<8x8xf32>
    %13 = vector.multi_reduction <add>, %12, %cst [2] : vector<8x8x64xf32> to vector<8x8xf32>
    %14 = vector.shape_cast %13 : vector<8x8xf32> to vector<8x8x1xf32>
    %cst_10 = arith.constant dense<0.000000e+00> : vector<8x1xf32>
    %15 = vector.multi_reduction <add>, %14, %cst_10 [1] : vector<8x8x1xf32> to vector<8x1xf32>
    %16 = vector.shape_cast %15 : vector<8x1xf32> to vector<8x1x1xf32>
    %cst_11 = arith.constant 0.001953125 : f32
    %17 = vector.broadcast %cst_11 : f32 to vector<8x1x1xf32>
    %18 = arith.mulf %16, %17 : vector<8x1x1xf32>
    %19 = vector.broadcast %18 : vector<8x1x1xf32> to vector<8x8x64xf32>
    %20 = arith.subf %12, %19 : vector<8x8x64xf32>
    %21 = arith.mulf %20, %20 : vector<8x8x64xf32>
    %cst_12 = arith.constant dense<0.000000e+00> : vector<8x8xf32>
    %22 = vector.multi_reduction <add>, %21, %cst_12 [2] : vector<8x8x64xf32> to vector<8x8xf32>
    %23 = vector.shape_cast %22 : vector<8x8xf32> to vector<8x8x1xf32>
    %cst_13 = arith.constant dense<0.000000e+00> : vector<8x1xf32>
    %24 = vector.multi_reduction <add>, %23, %cst_13 [1] : vector<8x8x1xf32> to vector<8x1xf32>
    %25 = vector.shape_cast %24 : vector<8x1xf32> to vector<8x1x1xf32>
    %cst_14 = arith.constant 0.001953125 : f32
    %26 = vector.broadcast %cst_14 : f32 to vector<8x1x1xf32>
    %27 = arith.mulf %25, %26 : vector<8x1x1xf32>
    %cst_15 = arith.constant 9.99999974E-6 : f32
    %28 = vector.broadcast %cst_15 : f32 to vector<8x1x1xf32>
    %29 = arith.addf %27, %28 : vector<8x1x1xf32>
    %30 = math.rsqrt %29 : vector<8x1x1xf32>
    %31 = vector.broadcast %30 : vector<8x1x1xf32> to vector<8x8x64xf32>
    %32 = arith.mulf %20, %31 : vector<8x8x64xf32>
    %33 = vector.shape_cast %32 : vector<8x8x64xf32> to vector<64x64xf32>
    %34 = arith.truncf %33 : vector<64x64xf32> to vector<64x64xbf16>
    %cst_16 = arith.constant dense<0.000000e+00> : vector<192x64xf32>
    %35 = tpu.matmul %0, %34, %cst_16 {dimension_numbers = #tpu.dot_dimension_numbers<[1], [0], [0], [1], [0, 0, 1, 1], [], []>} : vector<192x64xbf16>, vector<64x64xbf16>, vector<192x64xf32> -> vector<192x64xf32>
    %36 = vector.broadcast %2 : vector<192x1xf32> to vector<192x64xf32>
    %37 = arith.addf %35, %36 : vector<192x64xf32>
    %38 = vector.extract_strided_slice %37 {offsets = [0, 0], sizes = [64, 64], strides = [1, 1]} : vector<192x64xf32> to vector<64x64xf32>
    %39 = arith.truncf %38 : vector<64x64xf32> to vector<64x64xbf16>
    %cst_17 = arith.constant dense<0.000000e+00> : vector<64x64xf32>
    %40 = tpu.matmul %9, %39, %cst_17 {dimension_numbers = #tpu.dot_dimension_numbers<[1], [1], [0], [0], [0, 0, 1, 0], [], []>} : vector<64x64xbf16>, vector<64x64xbf16>, vector<64x64xf32> -> vector<64x64xf32>
    %41 = vector.broadcast %3 : vector<64x1xf32> to vector<64x64xf32>
    %42 = arith.addf %11, %41 : vector<64x64xf32>
    %43 = vector.extract_strided_slice %40 {offsets = [0, 0], sizes = [64, 16], strides = [1, 1]} : vector<64x64xf32> to vector<64x16xf32>
    %44 = arith.truncf %43 : vector<64x16xf32> to vector<64x16xbf16>
    %45 = vector.extract_strided_slice %37 {offsets = [64, 0], sizes = [16, 64], strides = [1, 1]} : vector<192x64xf32> to vector<16x64xf32>
    %46 = arith.truncf %45 : vector<16x64xf32> to vector<16x64xbf16>
    %47 = vector.extract_strided_slice %37 {offsets = [128, 0], sizes = [16, 64], strides = [1, 1]} : vector<192x64xf32> to vector<16x64xf32>
    %48 = arith.truncf %47 : vector<16x64xf32> to vector<16x64xbf16>
    %cst_18 = arith.constant dense<0.000000e+00> : vector<64x64xf32>
    %49 = tpu.matmul %44, %46, %cst_18 {dimension_numbers = #tpu.dot_dimension_numbers<[1], [0], [0], [1], [0, 0, 1, 1], [], []>} : vector<64x16xbf16>, vector<16x64xbf16>, vector<64x64xf32> -> vector<64x64xf32>
    %cst_19 = arith.constant dense<0xFF800000> : vector<64xf32>
    %50 = vector.multi_reduction <maximumf>, %49, %cst_19 [1] : vector<64x64xf32> to vector<64xf32>
    %51 = vector.shape_cast %50 : vector<64xf32> to vector<64x1xf32>
    %52 = vector.broadcast %51 : vector<64x1xf32> to vector<64x64xf32>
    %53 = arith.subf %49, %52 : vector<64x64xf32>
    %54 = math.exp %53 : vector<64x64xf32>
    %cst_20 = arith.constant dense<0.000000e+00> : vector<64xf32>
    %55 = vector.multi_reduction <add>, %54, %cst_20 [1] : vector<64x64xf32> to vector<64xf32>
    %56 = vector.shape_cast %55 : vector<64xf32> to vector<64x1xf32>
    %57 = tpu.reciprocal %56 {approx = true} : vector<64x1xf32> -> vector<64x1xf32>
    %58 = vector.broadcast %57 : vector<64x1xf32> to vector<64x64xf32>
    %59 = arith.mulf %54, %58 : vector<64x64xf32>
    %60 = arith.truncf %59 : vector<64x64xf32> to vector<64x64xbf16>
    %cst_21 = arith.constant dense<0.000000e+00> : vector<16x64xf32>
    %61 = tpu.matmul %48, %60, %cst_21 {dimension_numbers = #tpu.dot_dimension_numbers<[1], [1], [0], [0], [0, 0, 1, 0], [], []>} : vector<16x64xbf16>, vector<64x64xbf16>, vector<16x64xf32> -> vector<16x64xf32>
    %62 = vector.extract_strided_slice %1 {offsets = [0, 0], sizes = [64, 16], strides = [1, 1]} : vector<64x64xbf16> to vector<64x16xbf16>
    %63 = arith.truncf %61 : vector<16x64xf32> to vector<16x64xbf16>
    %cst_22 = arith.constant dense<0.000000e+00> : vector<64x64xf32>
    %64 = tpu.matmul %62, %63, %cst_22 {dimension_numbers = #tpu.dot_dimension_numbers<[1], [0], [0], [1], [0, 0, 1, 1], [], []>} : vector<64x16xbf16>, vector<16x64xbf16>, vector<64x64xf32> -> vector<64x64xf32>
    %65 = arith.addf %42, %64 : vector<64x64xf32>
    %66 = vector.extract_strided_slice %40 {offsets = [0, 16], sizes = [64, 16], strides = [1, 1]} : vector<64x64xf32> to vector<64x16xf32>
    %67 = arith.truncf %66 : vector<64x16xf32> to vector<64x16xbf16>
    %68 = vector.extract_strided_slice %37 {offsets = [80, 0], sizes = [16, 64], strides = [1, 1]} : vector<192x64xf32> to vector<16x64xf32>
    %69 = arith.truncf %68 : vector<16x64xf32> to vector<16x64xbf16>
    %70 = vector.extract_strided_slice %37 {offsets = [144, 0], sizes = [16, 64], strides = [1, 1]} : vector<192x64xf32> to vector<16x64xf32>
    %71 = arith.truncf %70 : vector<16x64xf32> to vector<16x64xbf16>
    %cst_23 = arith.constant dense<0.000000e+00> : vector<64x64xf32>
    %72 = tpu.matmul %67, %69, %cst_23 {dimension_numbers = #tpu.dot_dimension_numbers<[1], [0], [0], [1], [0, 0, 1, 1], [], []>} : vector<64x16xbf16>, vector<16x64xbf16>, vector<64x64xf32> -> vector<64x64xf32>
    %cst_24 = arith.constant dense<0xFF800000> : vector<64xf32>
    %73 = vector.multi_reduction <maximumf>, %72, %cst_24 [1] : vector<64x64xf32> to vector<64xf32>
    %74 = vector.shape_cast %73 : vector<64xf32> to vector<64x1xf32>
    %75 = vector.broadcast %74 : vector<64x1xf32> to vector<64x64xf32>
    %76 = arith.subf %72, %75 : vector<64x64xf32>
    %77 = math.exp %76 : vector<64x64xf32>
    %cst_25 = arith.constant dense<0.000000e+00> : vector<64xf32>
    %78 = vector.multi_reduction <add>, %77, %cst_25 [1] : vector<64x64xf32> to vector<64xf32>
    %79 = vector.shape_cast %78 : vector<64xf32> to vector<64x1xf32>
    %80 = tpu.reciprocal %79 {approx = true} : vector<64x1xf32> -> vector<64x1xf32>
    %81 = vector.broadcast %80 : vector<64x1xf32> to vector<64x64xf32>
    %82 = arith.mulf %77, %81 : vector<64x64xf32>
    %83 = arith.truncf %82 : vector<64x64xf32> to vector<64x64xbf16>
    %cst_26 = arith.constant dense<0.000000e+00> : vector<16x64xf32>
    %84 = tpu.matmul %71, %83, %cst_26 {dimension_numbers = #tpu.dot_dimension_numbers<[1], [1], [0], [0], [0, 0, 1, 0], [], []>} : vector<16x64xbf16>, vector<64x64xbf16>, vector<16x64xf32> -> vector<16x64xf32>
    %85 = vector.extract_strided_slice %1 {offsets = [0, 16], sizes = [64, 16], strides = [1, 1]} : vector<64x64xbf16> to vector<64x16xbf16>
    %86 = arith.truncf %84 : vector<16x64xf32> to vector<16x64xbf16>
    %cst_27 = arith.constant dense<0.000000e+00> : vector<64x64xf32>
    %87 = tpu.matmul %85, %86, %cst_27 {dimension_numbers = #tpu.dot_dimension_numbers<[1], [0], [0], [1], [0, 0, 1, 1], [], []>} : vector<64x16xbf16>, vector<16x64xbf16>, vector<64x64xf32> -> vector<64x64xf32>
    %88 = arith.addf %65, %87 : vector<64x64xf32>
    %89 = vector.extract_strided_slice %40 {offsets = [0, 32], sizes = [64, 16], strides = [1, 1]} : vector<64x64xf32> to vector<64x16xf32>
    %90 = arith.truncf %89 : vector<64x16xf32> to vector<64x16xbf16>
    %91 = vector.extract_strided_slice %37 {offsets = [96, 0], sizes = [16, 64], strides = [1, 1]} : vector<192x64xf32> to vector<16x64xf32>
    %92 = arith.truncf %91 : vector<16x64xf32> to vector<16x64xbf16>
    %93 = vector.extract_strided_slice %37 {offsets = [160, 0], sizes = [16, 64], strides = [1, 1]} : vector<192x64xf32> to vector<16x64xf32>
    %94 = arith.truncf %93 : vector<16x64xf32> to vector<16x64xbf16>
    %cst_28 = arith.constant dense<0.000000e+00> : vector<64x64xf32>
    %95 = tpu.matmul %90, %92, %cst_28 {dimension_numbers = #tpu.dot_dimension_numbers<[1], [0], [0], [1], [0, 0, 1, 1], [], []>} : vector<64x16xbf16>, vector<16x64xbf16>, vector<64x64xf32> -> vector<64x64xf32>
    %cst_29 = arith.constant dense<0xFF800000> : vector<64xf32>
    %96 = vector.multi_reduction <maximumf>, %95, %cst_29 [1] : vector<64x64xf32> to vector<64xf32>
    %97 = vector.shape_cast %96 : vector<64xf32> to vector<64x1xf32>
    %98 = vector.broadcast %97 : vector<64x1xf32> to vector<64x64xf32>
    %99 = arith.subf %95, %98 : vector<64x64xf32>
    %100 = math.exp %99 : vector<64x64xf32>
    %cst_30 = arith.constant dense<0.000000e+00> : vector<64xf32>
    %101 = vector.multi_reduction <add>, %100, %cst_30 [1] : vector<64x64xf32> to vector<64xf32>
    %102 = vector.shape_cast %101 : vector<64xf32> to vector<64x1xf32>
    %103 = tpu.reciprocal %102 {approx = true} : vector<64x1xf32> -> vector<64x1xf32>
    %104 = vector.broadcast %103 : vector<64x1xf32> to vector<64x64xf32>
    %105 = arith.mulf %100, %104 : vector<64x64xf32>
    %106 = arith.truncf %105 : vector<64x64xf32> to vector<64x64xbf16>
    %cst_31 = arith.constant dense<0.000000e+00> : vector<16x64xf32>
    %107 = tpu.matmul %94, %106, %cst_31 {dimension_numbers = #tpu.dot_dimension_numbers<[1], [1], [0], [0], [0, 0, 1, 0], [], []>} : vector<16x64xbf16>, vector<64x64xbf16>, vector<16x64xf32> -> vector<16x64xf32>
    %108 = vector.extract_strided_slice %1 {offsets = [0, 32], sizes = [64, 16], strides = [1, 1]} : vector<64x64xbf16> to vector<64x16xbf16>
    %109 = arith.truncf %107 : vector<16x64xf32> to vector<16x64xbf16>
    %cst_32 = arith.constant dense<0.000000e+00> : vector<64x64xf32>
    %110 = tpu.matmul %108, %109, %cst_32 {dimension_numbers = #tpu.dot_dimension_numbers<[1], [0], [0], [1], [0, 0, 1, 1], [], []>} : vector<64x16xbf16>, vector<16x64xbf16>, vector<64x64xf32> -> vector<64x64xf32>
    %111 = arith.addf %88, %110 : vector<64x64xf32>
    %112 = vector.extract_strided_slice %40 {offsets = [0, 48], sizes = [64, 16], strides = [1, 1]} : vector<64x64xf32> to vector<64x16xf32>
    %113 = arith.truncf %112 : vector<64x16xf32> to vector<64x16xbf16>
    %114 = vector.extract_strided_slice %37 {offsets = [112, 0], sizes = [16, 64], strides = [1, 1]} : vector<192x64xf32> to vector<16x64xf32>
    %115 = arith.truncf %114 : vector<16x64xf32> to vector<16x64xbf16>
    %116 = vector.extract_strided_slice %37 {offsets = [176, 0], sizes = [16, 64], strides = [1, 1]} : vector<192x64xf32> to vector<16x64xf32>
    %117 = arith.truncf %116 : vector<16x64xf32> to vector<16x64xbf16>
    %cst_33 = arith.constant dense<0.000000e+00> : vector<64x64xf32>
    %118 = tpu.matmul %113, %115, %cst_33 {dimension_numbers = #tpu.dot_dimension_numbers<[1], [0], [0], [1], [0, 0, 1, 1], [], []>} : vector<64x16xbf16>, vector<16x64xbf16>, vector<64x64xf32> -> vector<64x64xf32>
    %cst_34 = arith.constant dense<0xFF800000> : vector<64xf32>
    %119 = vector.multi_reduction <maximumf>, %118, %cst_34 [1] : vector<64x64xf32> to vector<64xf32>
    %120 = vector.shape_cast %119 : vector<64xf32> to vector<64x1xf32>
    %121 = vector.broadcast %120 : vector<64x1xf32> to vector<64x64xf32>
    %122 = arith.subf %118, %121 : vector<64x64xf32>
    %123 = math.exp %122 : vector<64x64xf32>
    %cst_35 = arith.constant dense<0.000000e+00> : vector<64xf32>
    %124 = vector.multi_reduction <add>, %123, %cst_35 [1] : vector<64x64xf32> to vector<64xf32>
    %125 = vector.shape_cast %124 : vector<64xf32> to vector<64x1xf32>
    %126 = tpu.reciprocal %125 {approx = true} : vector<64x1xf32> -> vector<64x1xf32>
    %127 = vector.broadcast %126 : vector<64x1xf32> to vector<64x64xf32>
    %128 = arith.mulf %123, %127 : vector<64x64xf32>
    %129 = arith.truncf %128 : vector<64x64xf32> to vector<64x64xbf16>
    %cst_36 = arith.constant dense<0.000000e+00> : vector<16x64xf32>
    %130 = tpu.matmul %117, %129, %cst_36 {dimension_numbers = #tpu.dot_dimension_numbers<[1], [1], [0], [0], [0, 0, 1, 0], [], []>} : vector<16x64xbf16>, vector<64x64xbf16>, vector<16x64xf32> -> vector<16x64xf32>
    %131 = vector.extract_strided_slice %1 {offsets = [0, 48], sizes = [64, 16], strides = [1, 1]} : vector<64x64xbf16> to vector<64x16xbf16>
    %132 = arith.truncf %130 : vector<16x64xf32> to vector<16x64xbf16>
    %cst_37 = arith.constant dense<0.000000e+00> : vector<64x64xf32>
    %133 = tpu.matmul %131, %132, %cst_37 {dimension_numbers = #tpu.dot_dimension_numbers<[1], [0], [0], [1], [0, 0, 1, 1], [], []>} : vector<64x16xbf16>, vector<16x64xbf16>, vector<64x64xf32> -> vector<64x64xf32>
    %134 = arith.addf %111, %133 : vector<64x64xf32>
    %c0_38 = arith.constant 0 : index
    %c0_39 = arith.constant 0 : index
    %c0_40 = arith.constant 0 : index
    %135 = vector.load %arg6[%c0_38, %c0_39, %c0_40] : memref<1x64x64xf32, #tpu.memory_space<vmem>>, vector<1x64x64xf32>
    %136 = vector.shape_cast %135 : vector<1x64x64xf32> to vector<64x64xf32>
    %137 = vector.shape_cast %134 : vector<64x64xf32> to vector<1x64x64xf32>
    tpu.vector_store %arg6[%c0_38, %c0_39, %c0_40], %137 {strides = array<i32>} : memref<1x64x64xf32, #tpu.memory_space<vmem>>, vector<1x64x64xf32>,
    return
  }
  func.func @transform_0(%arg0: i32) -> (i32, i32, i32) {
    %c0_i32 = arith.constant 0 : i32
    %c0_i32_0 = arith.constant 0 : i32
    %c0_i32_1 = arith.constant 0 : i32
    return %arg0, %c0_i32, %c0_i32_0 : i32, i32, i32
  }
  func.func @transform_1(%arg0: i32) -> (i32, i32) {
    %c0_i32 = arith.constant 0 : i32
    %c0_i32_0 = arith.constant 0 : i32
    %c0_i32_1 = arith.constant 0 : i32
    return %c0_i32, %c0_i32_0 : i32, i32
  }
  func.func @transform_2(%arg0: i32) -> (i32, i32) {
    %c0_i32 = arith.constant 0 : i32
    %c0_i32_0 = arith.constant 0 : i32
    %c0_i32_1 = arith.constant 0 : i32
    return %c0_i32, %c0_i32_0 : i32, i32
  }
  func.func @transform_3(%arg0: i32) -> (i32, i32) {
    %c0_i32 = arith.constant 0 : i32
    %c0_i32_0 = arith.constant 0 : i32
    %c0_i32_1 = arith.constant 0 : i32
    return %c0_i32, %c0_i32_0 : i32, i32
  }
  func.func @transform_4(%arg0: i32) -> (i32, i32) {
    %c0_i32 = arith.constant 0 : i32
    %c0_i32_0 = arith.constant 0 : i32
    %c0_i32_1 = arith.constant 0 : i32
    return %c0_i32, %c0_i32_0 : i32, i32
  }
  func.func @transform_5(%arg0: i32) -> (i32, i32, i32) {
    %c0_i32 = arith.constant 0 : i32
    %c0_i32_0 = arith.constant 0 : i32
    %c0_i32_1 = arith.constant 0 : i32
    return %arg0, %c0_i32, %c0_i32_0 : i32, i32, i32
  }
}

</mosaic_0001>

<llo_original>
// kernel: attention_block_forward.1
$region0: #{attention_block_forward.1}
  #allocation0 [shape = 'u32[]', space=smem, size = 0x4, offset = 0x4, fixed_abs, tag = 'smem constant byte address 0x4 - core index']
  #allocation1 [shape = 'u32[144,128]{1,0:T(1,128)}', space=vmem, size = 0x12000, scoped, tag = 'internal scratch']
  %s0 = inlined_call_operand.vmem [shape: f32[2,64,64], index: 0, kind: input, shape index: {}, may-alias: {0,5}]
  %s1 = inlined_call_operand.vmem [shape: bf16[192,64], index: 1, kind: input, shape index: {}]
  %s2 = inlined_call_operand.vmem [shape: bf16[64,64], index: 2, kind: input, shape index: {}]
  %s3 = inlined_call_operand.vmem [shape: f32[192,1], index: 3, kind: input, shape index: {}]
  %s4 = inlined_call_operand.vmem [shape: f32[64,1], index: 4, kind: input, shape index: {}]
  %s5 = inlined_call_operand.vmem [shape: f32[2,64,64], index: 5, kind: output, shape index: {}, may-alias: {0,5}]
  %s6 = sld [smem:[#allocation0]]
  $region53: #{attention_block_forward.1} parent=0
    _
  %s8 = ssub.s32 1, %s6
  %s9 = scalar_select 0, %s8, %s6
  loop: start=0, step=1, limit=4
  $region2: #{attention_block_forward.1} parent=0 // loop_pre_header
    _
  $region3: #{attention_block_forward.1} parent=0 // loop_header
    %s11 = sphi 0, %s15
    %p12 = scmp.ge.s32.totalorder %s11, 4
    %s21 = sphi 0, %s23
    %s24 = sphi 0, %s21
    %s25 = sphi 0, %s24
    %s41 = sphi 0, %s25
    %s45 = sphi 0, %s45
    %s47 = sphi 0, %s45
    %s48 = sphi 0, %s47
    %s62 = sphi 0, %s48
    %s66 = sphi 0, %s66
    %s68 = sphi 0, %s66
    %s69 = sphi 0, %s68
    %s83 = sphi 0, %s69
    %s87 = sphi 0, %s87
    %s89 = sphi 0, %s87
    %s90 = sphi 0, %s89
    %s104 = sphi 0, %s90
    %s108 = sphi 0, %s108
    %s110 = sphi 0, %s108
    %s111 = sphi 0, %s110
    %s125 = sphi 0, %s111
    %s131 = sphi 0, %s133
    %s134 = sphi 0, %s131
    %s135 = sphi 0, %s134
    %s151 = sphi 0, %s135
  $region4: #{attention_block_forward.1} parent=0 // loop_header_branch
    %14 = sbr.rel (%p12) target = $region8
  $region5: #{attention_block_forward.1} parent=0 // loop_body
    %s16 = ssub.s32 %s11, 1
    %s17 = ssub.s32 %s11, 2
    %s18 = sadd.s32 %s11, 1
    %s19 = ssub.s32 %s11, %s18
    %p20 = scmp.eq.s32.totalorder %s19, 0
    %s22 = sadd.s32 %s21, 1
    %s23 = scalar_select %p20, %s21, %s22
    %p26 = pneg %p20
    %p27 = scmp.eq.s32.totalorder %s11, 1
    %p28 = por %p26, %p27
    %p29 = scmp.ne.s32.totalorder %s21, %s24
    %p30 = scmp.eq.s32.totalorder %s11, 0
    %p31 = por %p29, %p30
    %p32 = scmp.ne.s32.totalorder %s21, %s24
    %p33 = scmp.eq.s32.totalorder %s16, 1
    %p34 = por %p32, %p33
    %p35 = scmp.ne.s32.totalorder %s24, %s25
    %p36 = scmp.eq.s32.totalorder %s16, 0
    %p37 = por %p35, %p36
    %p38 = scmp.ne.s32.totalorder %s24, %s25
    %p39 = scmp.eq.s32.totalorder %s17, 1
    %p40 = por %p38, %p39
    %p42 = scmp.ne.s32.totalorder %s25, %s41
    %p43 = scmp.eq.s32.totalorder %s17, 0
    %p44 = por %p42, %p43
    %s46 = sadd.s32 %s45, 1
    %p49 = scmp.eq.s32.totalorder %s11, 1
    %p50 = scmp.ne.s32.totalorder %s45, %s47
    %p51 = scmp.eq.s32.totalorder %s11, 0
    %p52 = por %p50, %p51
    %p53 = scmp.ne.s32.totalorder %s45, %s47
    %p54 = scmp.eq.s32.totalorder %s16, 1
    %p55 = por %p53, %p54
    %p56 = scmp.ne.s32.totalorder %s47, %s48
    %p57 = scmp.eq.s32.totalorder %s16, 0
    %p58 = por %p56, %p57
    %p59 = scmp.ne.s32.totalorder %s47, %s48
    %p60 = scmp.eq.s32.totalorder %s17, 1
    %p61 = por %p59, %p60
    %p63 = scmp.ne.s32.totalorder %s48, %s62
    %p64 = scmp.eq.s32.totalorder %s17, 0
    %p65 = por %p63, %p64
    %s67 = sadd.s32 %s66, 1
    %p70 = scmp.eq.s32.totalorder %s11, 1
    %p71 = scmp.ne.s32.totalorder %s66, %s68
    %p72 = scmp.eq.s32.totalorder %s11, 0
    %p73 = por %p71, %p72
    %p74 = scmp.ne.s32.totalorder %s66, %s68
    %p75 = scmp.eq.s32.totalorder %s16, 1
    %p76 = por %p74, %p75
    %p77 = scmp.ne.s32.totalorder %s68, %s69
    %p78 = scmp.eq.s32.totalorder %s16, 0
    %p79 = por %p77, %p78
    %p80 = scmp.ne.s32.totalorder %s68, %s69
    %p81 = scmp.eq.s32.totalorder %s17, 1
    %p82 = por %p80, %p81
    %p84 = scmp.ne.s32.totalorder %s69, %s83
    %p85 = scmp.eq.s32.totalorder %s17, 0
    %p86 = por %p84, %p85
    %s88 = sadd.s32 %s87, 1
    %p91 = scmp.eq.s32.totalorder %s11, 1
    %p92 = scmp.ne.s32.totalorder %s87, %s89
    %p93 = scmp.eq.s32.totalorder %s11, 0
    %p94 = por %p92, %p93
    %p95 = scmp.ne.s32.totalorder %s87, %s89
    %p96 = scmp.eq.s32.totalorder %s16, 1
    %p97 = por %p95, %p96
    %p98 = scmp.ne.s32.totalorder %s89, %s90
    %p99 = scmp.eq.s32.totalorder %s16, 0
    %p100 = por %p98, %p99
    %p101 = scmp.ne.s32.totalorder %s89, %s90
    %p102 = scmp.eq.s32.totalorder %s17, 1
    %p103 = por %p101, %p102
    %p105 = scmp.ne.s32.totalorder %s90, %s104
    %p106 = scmp.eq.s32.totalorder %s17, 0
    %p107 = por %p105, %p106
    %s109 = sadd.s32 %s108, 1
    %p112 = scmp.eq.s32.totalorder %s11, 1
    %p113 = scmp.ne.s32.totalorder %s108, %s110
    %p114 = scmp.eq.s32.totalorder %s11, 0
    %p115 = por %p113, %p114
    %p116 = scmp.ne.s32.totalorder %s108, %s110
    %p117 = scmp.eq.s32.totalorder %s16, 1
    %p118 = por %p116, %p117
    %p119 = scmp.ne.s32.totalorder %s110, %s111
    %p120 = scmp.eq.s32.totalorder %s16, 0
    %p121 = por %p119, %p120
    %p122 = scmp.ne.s32.totalorder %s110, %s111
    %p123 = scmp.eq.s32.totalorder %s17, 1
    %p124 = por %p122, %p123
    %p126 = scmp.ne.s32.totalorder %s111, %s125
    %p127 = scmp.eq.s32.totalorder %s17, 0
    %p128 = por %p126, %p127
    %s129 = ssub.s32 %s11, %s18
    %p130 = scmp.eq.s32.totalorder %s129, 0
    %s132 = sadd.s32 %s131, 1
    %s133 = scalar_select %p130, %s131, %s132
    %p136 = pneg %p130
    %p137 = scmp.eq.s32.totalorder %s11, 1
    %p138 = por %p136, %p137
    %p139 = scmp.ne.s32.totalorder %s131, %s134
    %p140 = scmp.eq.s32.totalorder %s11, 0
    %p141 = por %p139, %p140
    %p142 = scmp.ne.s32.totalorder %s131, %s134
    %p143 = scmp.eq.s32.totalorder %s16, 1
    %p144 = por %p142, %p143
    %p145 = scmp.ne.s32.totalorder %s134, %s135
    %p146 = scmp.eq.s32.totalorder %s16, 0
    %p147 = por %p145, %p146
    %p148 = scmp.ne.s32.totalorder %s134, %s135
    %p149 = scmp.eq.s32.totalorder %s17, 1
    %p150 = por %p148, %p149
    %p152 = scmp.ne.s32.totalorder %s135, %s151
    %p153 = scmp.eq.s32.totalorder %s17, 0
    %p154 = por %p152, %p153
    %p155 = scmp.le.s32.totalorder 1, %s11
    %p156 = scmp.lt.s32.totalorder %s11, 3
    %p157 = pnand %p155, %p156
    %p158 = pneg %p157
    // Predicated region
    $region9: #{attention_block_forward.1} parent=5 // pred_check
      _
    $region10: #{attention_block_forward.1} parent=5 // pred_check_branch
      %160 = sbr.rel (%p157) target = $region12
    $region11: #{attention_block_forward.1} parent=5 // pred_region
      %s161 = ssub.s32 %s11, 1
      // Predicated region
      $region13: #{attention_block_forward.1} parent=11 // pred_check
        %p162 = pneg %p58
      $region14: #{attention_block_forward.1} parent=11 // pred_check_branch
        %164 = sbr.rel (%p162) target = $region16
      $region15: #{attention_block_forward.1} parent=11 // pred_region
        _
      $region16: #{attention_block_forward.1} parent=11 // pred_fallthru
        _
      // Predicated region
      $region17: #{attention_block_forward.1} parent=11 // pred_check
        %p165 = pneg %p79
      $region18: #{attention_block_forward.1} parent=11 // pred_check_branch
        %167 = sbr.rel (%p165) target = $region20
      $region19: #{attention_block_forward.1} parent=11 // pred_region
        _
      $region20: #{attention_block_forward.1} parent=11 // pred_fallthru
        _
      // Predicated region
      $region21: #{attention_block_forward.1} parent=11 // pred_check
        %p168 = pneg %p100
      $region22: #{attention_block_forward.1} parent=11 // pred_check_branch
        %170 = sbr.rel (%p168) target = $region24
      $region23: #{attention_block_forward.1} parent=11 // pred_region
        _
      $region24: #{attention_block_forward.1} parent=11 // pred_fallthru
        _
      // Predicated region
      $region25: #{attention_block_forward.1} parent=11 // pred_check
        %p171 = pneg %p121
      $region26: #{attention_block_forward.1} parent=11 // pred_check_branch
        %173 = sbr.rel (%p171) target = $region28
      $region27: #{attention_block_forward.1} parent=11 // pred_region
        _
      $region28: #{attention_block_forward.1} parent=11 // pred_fallthru
        _
    $region12: #{attention_block_forward.1} parent=5 // pred_fallthru
      _
    %p174 = scmp.lt.s32.totalorder %s11, 2
    // Predicated region
    $region29: #{attention_block_forward.1} parent=5 // pred_check
      %p175 = pneg %p174
    $region30: #{attention_block_forward.1} parent=5 // pred_check_branch
      %177 = sbr.rel (%p175) target = $region32
    $region31: #{attention_block_forward.1} parent=5 // pred_region
      // Predicated region
      $region33: #{attention_block_forward.1} parent=31 // pred_check
        %p178 = pneg %p31
      $region34: #{attention_block_forward.1} parent=31 // pred_check_branch
        %180 = sbr.rel (%p178) target = $region36
      $region35: #{attention_block_forward.1} parent=31 // pred_region
        %p181 = scmp.lt.s32.totalorder %s11, 1
        %s182 = scalar_select %p181, %s11, 1
        %s183 = smul.addr %s182, 8
        %s184 = smul.addr %s183, 8
        %s185 = scalar_lea.vmem %s0, %s184
      $region36: #{attention_block_forward.1} parent=31 // pred_fallthru
        _
    $region32: #{attention_block_forward.1} parent=5 // pred_fallthru
      _
    %p186 = scmp.le.s32.totalorder 1, %s11
    %p187 = scmp.lt.s32.totalorder %s11, 3
    %p188 = pnand %p186, %p187
    %p189 = pneg %p188
    // Predicated region
    $region37: #{attention_block_forward.1} parent=5 // pred_check
      _
    $region38: #{attention_block_forward.1} parent=5 // pred_check_branch
      %191 = sbr.rel (%p188) target = $region40
    $region39: #{attention_block_forward.1} parent=5 // pred_region
      %s192 = ssub.s32 %s11, 1
      %p193 = scmp.lt.s32.totalorder %s16, 1
      %s194 = scalar_select %p193, %s16, 1
      %s195 = smul.addr %s194, 8
      %s196 = smul.addr %s195, 8
      %s197 = scalar_lea.vmem %s0, %s196
      %p198 = pneg %p37
      %p199 = pneg %p34
      %p200 = pneg %p58
      %p201 = pneg %p55
      %p202 = pneg %p79
      %p203 = pneg %p76
      %p204 = pneg %p100
      %p205 = pneg %p97
      %p206 = pneg %p121
      %p207 = pneg %p118
      %p208 = pneg %p147
      %p209 = pneg %p144
      %p210 = scmp.lt.s32.totalorder %s16, 1
      %s211 = scalar_select %p210, %s16, 1
      %s212 = smul.addr %s211, 8
      %s213 = smul.addr %s212, 8
      %s214 = scalar_lea.vmem %s5, %s213
      %p215 = scmp.lt.s32.totalorder %s16, 1
      %s216 = scalar_select %p215, %s16, 1
      %s217 = smul.addr %s216, 8
      %s218 = smul.addr %s217, 8
      %s219 = scalar_lea.vmem %s0, %s218
      %p220 = scmp.lt.s32.totalorder %s16, 1
      %s221 = scalar_select %p220, %s16, 1
      %s222 = smul.addr %s221, 8
      %s223 = smul.addr %s222, 8
      %s224 = scalar_lea.vmem %s5, %s223
      %v226 = vld [vmem:[%s1] sm:$0xf]
      %v227 = vld [vmem:[%s1 + $0x4] sm:$0xf]
      %v228 = vld [vmem:[%s1 + $0x8] sm:$0xf]
      %v229 = vld [vmem:[%s1 + $0xc] sm:$0xf]
      %v230 = vld [vmem:[%s1 + $0x10] sm:$0xf]
      %v231 = vld [vmem:[%s1 + $0x14] sm:$0xf]
      %v232 = vld [vmem:[%s1 + $0x18] sm:$0xf]
      %v233 = vld [vmem:[%s1 + $0x1c] sm:$0xf]
      %v234 = vld [vmem:[%s1 + $0x20] sm:$0xf]
      %v235 = vld [vmem:[%s1 + $0x24] sm:$0xf]
      %v236 = vld [vmem:[%s1 + $0x28] sm:$0xf]
      %v237 = vld [vmem:[%s1 + $0x2c] sm:$0xf]
      %v238 = vld [vmem:[%s1 + $0x30] sm:$0xf]
      %v239 = vld [vmem:[%s1 + $0x34] sm:$0xf]
      %v240 = vld [vmem:[%s1 + $0x38] sm:$0xf]
      %v241 = vld [vmem:[%s1 + $0x3c] sm:$0xf]
      %v242 = vld [vmem:[%s1 + $0x40] sm:$0xf]
      %v243 = vld [vmem:[%s1 + $0x44] sm:$0xf]
      %v244 = vld [vmem:[%s1 + $0x48] sm:$0xf]
      %v245 = vld [vmem:[%s1 + $0x4c] sm:$0xf]
      %v246 = vld [vmem:[%s1 + $0x50] sm:$0xf]
      %v247 = vld [vmem:[%s1 + $0x54] sm:$0xf]
      %v248 = vld [vmem:[%s1 + $0x58] sm:$0xf]
      %v249 = vld [vmem:[%s1 + $0x5c] sm:$0xf]
      %v250 = vld [vmem:[%s2] sm:$0xf]
      %v251 = vld [vmem:[%s2 + $0x4] sm:$0xf]
      %v252 = vld [vmem:[%s2 + $0x8] sm:$0xf]
      %v253 = vld [vmem:[%s2 + $0xc] sm:$0xf]
      %v254 = vld [vmem:[%s2 + $0x10] sm:$0xf]
      %v255 = vld [vmem:[%s2 + $0x14] sm:$0xf]
      %v256 = vld [vmem:[%s2 + $0x18] sm:$0xf]
      %v257 = vld [vmem:[%s2 + $0x1c] sm:$0xf]
      %v258 = vld [vmem:[%s3] sm:$0xff]
      %v259 = vld [vmem:[%s3 + $0x8] sm:$0xff]
      %v260 = vld [vmem:[%s3 + $0x10] sm:$0xff]
      %v261 = vld [vmem:[%s3 + $0x18] sm:$0xff]
      %v262 = vld [vmem:[%s3 + $0x20] sm:$0xff]
      %v263 = vld [vmem:[%s3 + $0x28] sm:$0xff]
      %v264 = vld [vmem:[%s3 + $0x30] sm:$0xff]
      %v265 = vld [vmem:[%s3 + $0x38] sm:$0xff]
      %v266 = vld [vmem:[%s3 + $0x40] sm:$0xff]
      %v267 = vld [vmem:[%s3 + $0x48] sm:$0xff]
      %v268 = vld [vmem:[%s3 + $0x50] sm:$0xff]
      %v269 = vld [vmem:[%s3 + $0x58] sm:$0xff]
      %v270 = vld [vmem:[%s3 + $0x60] sm:$0xff]
      %v271 = vld [vmem:[%s3 + $0x68] sm:$0xff]
      %v272 = vld [vmem:[%s3 + $0x70] sm:$0xff]
      %v273 = vld [vmem:[%s3 + $0x78] sm:$0xff]
      %v274 = vld [vmem:[%s3 + $0x80] sm:$0xff]
      %v275 = vld [vmem:[%s3 + $0x88] sm:$0xff]
      %v276 = vld [vmem:[%s3 + $0x90] sm:$0xff]
      %v277 = vld [vmem:[%s3 + $0x98] sm:$0xff]
      %v278 = vld [vmem:[%s3 + $0xa0] sm:$0xff]
      %v279 = vld [vmem:[%s3 + $0xa8] sm:$0xff]
      %v280 = vld [vmem:[%s3 + $0xb0] sm:$0xff]
      %v281 = vld [vmem:[%s3 + $0xb8] sm:$0xff]
      %v282 = vld [vmem:[%s4] sm:$0xff]
      %v283 = vld [vmem:[%s4 + $0x8] sm:$0xff]
      %v284 = vld [vmem:[%s4 + $0x10] sm:$0xff]
      %v285 = vld [vmem:[%s4 + $0x18] sm:$0xff]
      %v286 = vld [vmem:[%s4 + $0x20] sm:$0xff]
      %v287 = vld [vmem:[%s4 + $0x28] sm:$0xff]
      %v288 = vld [vmem:[%s4 + $0x30] sm:$0xff]
      %v289 = vld [vmem:[%s4 + $0x38] sm:$0xff]
      %v290 = vlaneseq
      %v291 = vshrl.u32 %v290, 7
      %v292 = vadd.s32 %v291, 8
      %v293 = vadd.s32 %v291, 16
      %v294 = vadd.s32 %v291, 24
      %v295 = vadd.s32 %v291, 32
      %v296 = vadd.s32 %v291, 40
      %v297 = vadd.s32 %v291, 48
      %v298 = vadd.s32 %v291, 56
      %v299 = vlaneseq
      %v300 = vand.u32 %v299, 127
      %vm301 = vcmp.eq.s32.totalorder %v291, %v300
      %vm302 = vcmp.eq.s32.totalorder %v292, %v300
      %vm303 = vcmp.eq.s32.totalorder %v293, %v300
      %vm304 = vcmp.eq.s32.totalorder %v294, %v300
      %vm305 = vcmp.eq.s32.totalorder %v295, %v300
      %vm306 = vcmp.eq.s32.totalorder %v296, %v300
      %vm307 = vcmp.eq.s32.totalorder %v297, %v300
      %vm308 = vcmp.eq.s32.totalorder %v298, %v300
      %v309 = vsel %vm301, 1, 0
      %v310 = vsel %vm302, 1, 0
      %v311 = vsel %vm303, 1, 0
      %v312 = vsel %vm304, 1, 0
      %v313 = vsel %vm305, 1, 0
      %v314 = vsel %vm306, 1, 0
      %v315 = vsel %vm307, 1, 0
      %v316 = vsel %vm308, 1, 0
      %v317 = vcvt.s32.f32 %v309
      %v318 = vcvt.s32.f32 %v310
      %v319 = vcvt.s32.f32 %v311
      %v320 = vcvt.s32.f32 %v312
      %v321 = vcvt.s32.f32 %v313
      %v322 = vcvt.s32.f32 %v314
      %v323 = vcvt.s32.f32 %v315
      %v324 = vcvt.s32.f32 %v316
      %v325 = vpack.c.bf16 %v318, %v317
      %v326 = vpack.c.bf16 %v320, %v319
      %v327 = vpack.c.bf16 %v322, %v321
      %v328 = vpack.c.bf16 %v324, %v323
      %v329 = vld [vmem:[%s219] sm:$0xff]
      %v330 = vld [vmem:[%s219 + $0x8] sm:$0xff]
      %v331 = vld [vmem:[%s219 + $0x10] sm:$0xff]
      %v332 = vld [vmem:[%s219 + $0x18] sm:$0xff]
      %v333 = vld [vmem:[%s219 + $0x20] sm:$0xff]
      %v334 = vld [vmem:[%s219 + $0x28] sm:$0xff]
      %v335 = vld [vmem:[%s219 + $0x30] sm:$0xff]
      %v336 = vld [vmem:[%s219 + $0x38] sm:$0xff]
      %vm337 = vcmask 523264
      %v338 = vsel %vm337, %v329, 0.0
      %339 = vadd.xlane.f32.xlu0 %v338
      %v340 = vpop.xlane.xlu0 %339
      %v341 = vsel %vm337, %v330, 0.0
      %342 = vadd.xlane.f32.xlu0 %v341
      %v343 = vpop.xlane.xlu0 %342
      %v344 = vsel %vm337, %v331, 0.0
      %345 = vadd.xlane.f32.xlu0 %v344
      %v346 = vpop.xlane.xlu0 %345
      %v347 = vsel %vm337, %v332, 0.0
      %348 = vadd.xlane.f32.xlu0 %v347
      %v349 = vpop.xlane.xlu0 %348
      %v350 = vsel %vm337, %v333, 0.0
      %351 = vadd.xlane.f32.xlu0 %v350
      %v352 = vpop.xlane.xlu0 %351
      %v353 = vsel %vm337, %v334, 0.0
      %354 = vadd.xlane.f32.xlu0 %v353
      %v355 = vpop.xlane.xlu0 %354
      %v356 = vsel %vm337, %v335, 0.0
      %357 = vadd.xlane.f32.xlu0 %v356
      %v358 = vpop.xlane.xlu0 %357
      %v359 = vsel %vm337, %v336, 0.0
      %360 = vadd.xlane.f32.xlu0 %v359
      %v361 = vpop.xlane.xlu0 %360
      %v362 = vrot.slane %v340, 4
      %v363 = vadd.f32 %v340, %v362
      %v364 = vrot.slane %v363, 2
      %v365 = vadd.f32 %v363, %v364
      %v366 = vrot.slane %v365, 1
      %v367 = vadd.f32 %v365, %v366
      %v368 = vrot.slane %v343, 4
      %v369 = vadd.f32 %v343, %v368
      %v370 = vrot.slane %v369, 2
      %v371 = vadd.f32 %v369, %v370
      %v372 = vrot.slane %v371, 1
      %v373 = vadd.f32 %v371, %v372
      %v374 = vrot.slane %v346, 4
      %v375 = vadd.f32 %v346, %v374
      %v376 = vrot.slane %v375, 2
      %v377 = vadd.f32 %v375, %v376
      %v378 = vrot.slane %v377, 1
      %v379 = vadd.f32 %v377, %v378
      %v380 = vrot.slane %v349, 4
      %v381 = vadd.f32 %v349, %v380
      %v382 = vrot.slane %v381, 2
      %v383 = vadd.f32 %v381, %v382
      %v384 = vrot.slane %v383, 1
      %v385 = vadd.f32 %v383, %v384
      %v386 = vrot.slane %v352, 4
      %v387 = vadd.f32 %v352, %v386
      %v388 = vrot.slane %v387, 2
      %v389 = vadd.f32 %v387, %v388
      %v390 = vrot.slane %v389, 1
      %v391 = vadd.f32 %v389, %v390
      %v392 = vrot.slane %v355, 4
      %v393 = vadd.f32 %v355, %v392
      %v394 = vrot.slane %v393, 2
      %v395 = vadd.f32 %v393, %v394
      %v396 = vrot.slane %v395, 1
      %v397 = vadd.f32 %v395, %v396
      %v398 = vrot.slane %v358, 4
      %v399 = vadd.f32 %v358, %v398
      %v400 = vrot.slane %v399, 2
      %v401 = vadd.f32 %v399, %v400
      %v402 = vrot.slane %v401, 1
      %v403 = vadd.f32 %v401, %v402
      %v404 = vrot.slane %v361, 4
      %v405 = vadd.f32 %v361, %v404
      %v406 = vrot.slane %v405, 2
      %v407 = vadd.f32 %v405, %v406
      %v408 = vrot.slane %v407, 1
      %v409 = vadd.f32 %v407, %v408
      %v410 = vmul.f32 %v367, 0.001953125
      %v411 = vmul.f32 %v373, 0.001953125
      %v412 = vmul.f32 %v379, 0.001953125
      %v413 = vmul.f32 %v385, 0.001953125
      %v414 = vmul.f32 %v391, 0.001953125
      %v415 = vmul.f32 %v397, 0.001953125
      %v416 = vmul.f32 %v403, 0.001953125
      %v417 = vmul.f32 %v409, 0.001953125
      %v418 = vsub.f32 %v329, %v410
      %v419 = vsub.f32 %v330, %v411
      %v420 = vsub.f32 %v331, %v412
      %v421 = vsub.f32 %v332, %v413
      %v422 = vsub.f32 %v333, %v414
      %v423 = vsub.f32 %v334, %v415
      %v424 = vsub.f32 %v335, %v416
      %v425 = vsub.f32 %v336, %v417
      %v426 = vmul.f32 %v418, %v418
      %v427 = vmul.f32 %v419, %v419
      %v428 = vmul.f32 %v420, %v420
      %v429 = vmul.f32 %v421, %v421
      %v430 = vmul.f32 %v422, %v422
      %v431 = vmul.f32 %v423, %v423
      %v432 = vmul.f32 %v424, %v424
      %v433 = vmul.f32 %v425, %v425
      %v434 = vsel %vm337, %v426, 0.0
      %435 = vadd.xlane.f32.xlu0 %v434
      %v436 = vpop.xlane.xlu0 %435
      %v437 = vsel %vm337, %v427, 0.0
      %438 = vadd.xlane.f32.xlu0 %v437
      %v439 = vpop.xlane.xlu0 %438
      %v440 = vsel %vm337, %v428, 0.0
      %441 = vadd.xlane.f32.xlu0 %v440
      %v442 = vpop.xlane.xlu0 %441
      %v443 = vsel %vm337, %v429, 0.0
      %444 = vadd.xlane.f32.xlu0 %v443
      %v445 = vpop.xlane.xlu0 %444
      %v446 = vsel %vm337, %v430, 0.0
      %447 = vadd.xlane.f32.xlu0 %v446
      %v448 = vpop.xlane.xlu0 %447
      %v449 = vsel %vm337, %v431, 0.0
      %450 = vadd.xlane.f32.xlu0 %v449
      %v451 = vpop.xlane.xlu0 %450
      %v452 = vsel %vm337, %v432, 0.0
      %453 = vadd.xlane.f32.xlu0 %v452
      %v454 = vpop.xlane.xlu0 %453
      %v455 = vsel %vm337, %v433, 0.0
      %456 = vadd.xlane.f32.xlu0 %v455
      %v457 = vpop.xlane.xlu0 %456
      %v458 = vrot.slane %v436, 4
      %v459 = vadd.f32 %v436, %v458
      %v460 = vrot.slane %v459, 2
      %v461 = vadd.f32 %v459, %v460
      %v462 = vrot.slane %v461, 1
      %v463 = vadd.f32 %v461, %v462
      %v464 = vrot.slane %v439, 4
      %v465 = vadd.f32 %v439, %v464
      %v466 = vrot.slane %v465, 2
      %v467 = vadd.f32 %v465, %v466
      %v468 = vrot.slane %v467, 1
      %v469 = vadd.f32 %v467, %v468
      %v470 = vrot.slane %v442, 4
      %v471 = vadd.f32 %v442, %v470
      %v472 = vrot.slane %v471, 2
      %v473 = vadd.f32 %v471, %v472
      %v474 = vrot.slane %v473, 1
      %v475 = vadd.f32 %v473, %v474
      %v476 = vrot.slane %v445, 4
      %v477 = vadd.f32 %v445, %v476
      %v478 = vrot.slane %v477, 2
      %v479 = vadd.f32 %v477, %v478
      %v480 = vrot.slane %v479, 1
      %v481 = vadd.f32 %v479, %v480
      %v482 = vrot.slane %v448, 4
      %v483 = vadd.f32 %v448, %v482
      %v484 = vrot.slane %v483, 2
      %v485 = vadd.f32 %v483, %v484
      %v486 = vrot.slane %v485, 1
      %v487 = vadd.f32 %v485, %v486
      %v488 = vrot.slane %v451, 4
      %v489 = vadd.f32 %v451, %v488
      %v490 = vrot.slane %v489, 2
      %v491 = vadd.f32 %v489, %v490
      %v492 = vrot.slane %v491, 1
      %v493 = vadd.f32 %v491, %v492
      %v494 = vrot.slane %v454, 4
      %v495 = vadd.f32 %v454, %v494
      %v496 = vrot.slane %v495, 2
      %v497 = vadd.f32 %v495, %v496
      %v498 = vrot.slane %v497, 1
      %v499 = vadd.f32 %v497, %v498
      %v500 = vrot.slane %v457, 4
      %v501 = vadd.f32 %v457, %v500
      %v502 = vrot.slane %v501, 2
      %v503 = vadd.f32 %v501, %v502
      %v504 = vrot.slane %v503, 1
      %v505 = vadd.f32 %v503, %v504
      %v506 = vmul.f32 %v463, 0.001953125
      %v507 = vmul.f32 %v469, 0.001953125
      %v508 = vmul.f32 %v475, 0.001953125
      %v509 = vmul.f32 %v481, 0.001953125
      %v510 = vmul.f32 %v487, 0.001953125
      %v511 = vmul.f32 %v493, 0.001953125
      %v512 = vmul.f32 %v499, 0.001953125
      %v513 = vmul.f32 %v505, 0.001953125
      %v514 = vadd.f32 %v506, 1e-05
      %v515 = vadd.f32 %v507, 1e-05
      %v516 = vadd.f32 %v508, 1e-05
      %v517 = vadd.f32 %v509, 1e-05
      %v518 = vadd.f32 %v510, 1e-05
      %v519 = vadd.f32 %v511, 1e-05
      %v520 = vadd.f32 %v512, 1e-05
      %v521 = vadd.f32 %v513, 1e-05
      %v522 = vrsqrt.pop %v514
      %v523 = vrsqrt.pop %v515
      %v524 = vrsqrt.pop %v516
      %v525 = vrsqrt.pop %v517
      %v526 = vrsqrt.pop %v518
      %v527 = vrsqrt.pop %v519
      %v528 = vrsqrt.pop %v520
      %v529 = vrsqrt.pop %v521
      %v530 = vmul.f32 %v418, %v522
      %v531 = vmul.f32 %v419, %v523
      %v532 = vmul.f32 %v420, %v524
      %v533 = vmul.f32 %v421, %v525
      %v534 = vmul.f32 %v422, %v526
      %v535 = vmul.f32 %v423, %v527
      %v536 = vmul.f32 %v424, %v528
      %v537 = vmul.f32 %v425, %v529
      %v538 = vpack.c.bf16 %v531, %v530
      %v539 = vpack.c.bf16 %v533, %v532
      %v540 = vpack.c.bf16 %v535, %v534
      %v541 = vpack.c.bf16 %v537, %v536
      %543 = vset.pattern.permute.xlu0 0
      %544 = vperm.xlu0 %543, %v258
      %v545 = vpop.permute.xlu0 %544
      %548 = vset.pattern.permute.xlu0 0
      %549 = vperm.xlu0 %548, %v259
      %v550 = vpop.permute.xlu0 %549
      %553 = vset.pattern.permute.xlu0 0
      %554 = vperm.xlu0 %553, %v260
      %v555 = vpop.permute.xlu0 %554
      %558 = vset.pattern.permute.xlu0 0
      %559 = vperm.xlu0 %558, %v261
      %v560 = vpop.permute.xlu0 %559
      %563 = vset.pattern.permute.xlu0 0
      %564 = vperm.xlu0 %563, %v262
      %v565 = vpop.permute.xlu0 %564
      %568 = vset.pattern.permute.xlu0 0
      %569 = vperm.xlu0 %568, %v263
      %v570 = vpop.permute.xlu0 %569
      %573 = vset.pattern.permute.xlu0 0
      %574 = vperm.xlu0 %573, %v264
      %v575 = vpop.permute.xlu0 %574
      %578 = vset.pattern.permute.xlu0 0
      %579 = vperm.xlu0 %578, %v265
      %v580 = vpop.permute.xlu0 %579
      %583 = vset.pattern.permute.xlu0 0
      %584 = vperm.xlu0 %583, %v266
      %v585 = vpop.permute.xlu0 %584
      %588 = vset.pattern.permute.xlu0 0
      %589 = vperm.xlu0 %588, %v267
      %v590 = vpop.permute.xlu0 %589
      %593 = vset.pattern.permute.xlu0 0
      %594 = vperm.xlu0 %593, %v268
      %v595 = vpop.permute.xlu0 %594
      %598 = vset.pattern.permute.xlu0 0
      %599 = vperm.xlu0 %598, %v269
      %v600 = vpop.permute.xlu0 %599
      %603 = vset.pattern.permute.xlu0 0
      %604 = vperm.xlu0 %603, %v270
      %v605 = vpop.permute.xlu0 %604
      %608 = vset.pattern.permute.xlu0 0
      %609 = vperm.xlu0 %608, %v271
      %v610 = vpop.permute.xlu0 %609
      %613 = vset.pattern.permute.xlu0 0
      %614 = vperm.xlu0 %613, %v272
      %v615 = vpop.permute.xlu0 %614
      %618 = vset.pattern.permute.xlu0 0
      %619 = vperm.xlu0 %618, %v273
      %v620 = vpop.permute.xlu0 %619
      %623 = vset.pattern.permute.xlu0 0
      %624 = vperm.xlu0 %623, %v274
      %v625 = vpop.permute.xlu0 %624
      %628 = vset.pattern.permute.xlu0 0
      %629 = vperm.xlu0 %628, %v275
      %v630 = vpop.permute.xlu0 %629
      %633 = vset.pattern.permute.xlu0 0
      %634 = vperm.xlu0 %633, %v276
      %v635 = vpop.permute.xlu0 %634
      %638 = vset.pattern.permute.xlu0 0
      %639 = vperm.xlu0 %638, %v277
      %v640 = vpop.permute.xlu0 %639
      %643 = vset.pattern.permute.xlu0 0
      %644 = vperm.xlu0 %643, %v278
      %v645 = vpop.permute.xlu0 %644
      %648 = vset.pattern.permute.xlu0 0
      %649 = vperm.xlu0 %648, %v279
      %v650 = vpop.permute.xlu0 %649
      %653 = vset.pattern.permute.xlu0 0
      %654 = vperm.xlu0 %653, %v280
      %v655 = vpop.permute.xlu0 %654
      %658 = vset.pattern.permute.xlu0 0
      %659 = vperm.xlu0 %658, %v281
      %v660 = vpop.permute.xlu0 %659
      %v686 = vunpack.c.l.b16 %v226
      %v687 = vunpack.c.l.b16 %v227
      %v688 = vunpack.c.l.b16 %v228
      %v689 = vunpack.c.l.b16 %v229
      %v690 = vunpack.c.l.b16 %v230
      %v691 = vunpack.c.l.b16 %v231
      %v692 = vunpack.c.l.b16 %v232
      %v693 = vunpack.c.l.b16 %v233
      %v694 = vunpack.c.l.b16 %v234
      %v695 = vunpack.c.l.b16 %v235
      %v696 = vunpack.c.l.b16 %v236
      %v697 = vunpack.c.l.b16 %v237
      %v698 = vunpack.c.l.b16 %v238
      %v699 = vunpack.c.l.b16 %v239
      %v700 = vunpack.c.l.b16 %v240
      %v701 = vunpack.c.l.b16 %v241
      %v702 = vunpack.c.l.b16 %v242
      %v703 = vunpack.c.l.b16 %v243
      %v704 = vunpack.c.l.b16 %v244
      %v705 = vunpack.c.l.b16 %v245
      %v706 = vunpack.c.l.b16 %v246
      %v707 = vunpack.c.l.b16 %v247
      %v708 = vunpack.c.l.b16 %v248
      %v709 = vunpack.c.l.b16 %v249
      %v710 = vpack.c.b16 %v687, %v686
      %v711 = vpack.c.b16 %v689, %v688
      %v712 = vpack.c.b16 %v691, %v690
      %v713 = vpack.c.b16 %v693, %v692
      %v714 = vpack.c.b16 %v695, %v694
      %v715 = vpack.c.b16 %v697, %v696
      %v716 = vpack.c.b16 %v699, %v698
      %v717 = vpack.c.b16 %v701, %v700
      %v718 = vpack.c.b16 %v703, %v702
      %v719 = vpack.c.b16 %v705, %v704
      %v720 = vpack.c.b16 %v707, %v706
      %v721 = vpack.c.b16 %v709, %v708
      %v723 = vsel %vm337, %v710, 0
      %v726 = vsel %vm337, %v711, 0
      %v729 = vsel %vm337, %v712, 0
      %v732 = vsel %vm337, %v713, 0
      %v735 = vsel %vm337, %v714, 0
      %v738 = vsel %vm337, %v715, 0
      %v741 = vsel %vm337, %v716, 0
      %v744 = vsel %vm337, %v717, 0
      %v747 = vsel %vm337, %v718, 0
      %v750 = vsel %vm337, %v719, 0
      %v753 = vsel %vm337, %v720, 0
      %v756 = vsel %vm337, %v721, 0
      %758 = vmatprep.subr.bf16.mxu0 0
      %759 = vmatpush1.bf16.msra.mxu0 %v538
      %760 = vmatprep.subr.bf16.mxu0 0
      %761 = vmatpush1.bf16.msra.mxu0 %v539
      %762 = vmatprep.subr.bf16.mxu0 0
      %763 = vmatpush1.bf16.msra.mxu0 %v540
      %764 = vmatprep.subr.bf16.mxu0 0
      %765 = vmatpush1.bf16.msra.mxu0 %v541
      %766 = vmatprep.subr.bf16.mxu0 0
      %767 = vmatpush1.bf16.msra.mxu0 0
      %768 = vmatprep.subr.bf16.mxu0 0
      %769 = vmatpush1.bf16.msra.mxu0 0
      %770 = vmatprep.subr.bf16.mxu0 0
      %771 = vmatpush1.bf16.msra.mxu0 0
      %772 = vmatprep.subr.bf16.mxu0 0
      %773 = vmatpush1.bf16.msra.mxu0 0
      %774 = vmatprep.subr.bf16.mxu0 0
      %775 = vmatpush1.bf16.msra.mxu0 0
      %776 = vmatprep.subr.bf16.mxu0 0
      %777 = vmatpush1.bf16.msra.mxu0 0
      %778 = vmatprep.subr.bf16.mxu0 0
      %779 = vmatpush1.bf16.msra.mxu0 0
      %780 = vmatprep.subr.bf16.mxu0 0
      %781 = vmatpush1.bf16.msra.mxu0 0
      %782 = vmatprep.subr.bf16.mxu0 0
      %783 = vmatpush1.bf16.msra.mxu0 0
      %784 = vmatprep.subr.bf16.mxu0 0
      %785 = vmatpush1.bf16.msra.mxu0 0
      %786 = vmatprep.subr.bf16.mxu0 0
      %787 = vmatpush1.bf16.msra.mxu0 0
      %788 = vmatprep.subr.bf16.mxu0 0
      %789 = vmatpush1.bf16.msra.mxu0 0
      %790 = vmatprep.mubr.bf16.mxu0 0
      %791 = vmatmul.mubr.bf16.gmra.mrb[0].mxu0 %v723
      %v792 = vpop.f32.mrb[0].mxu0
      %v793 = vadd.f32 %v545, %v792
      %v794 = vpop.f32.mrb[0].mxu0
      %v795 = vpop.f32.mrb[0].mxu0
      %v796 = vadd.f32 %v550, %v795
      %v797 = vpop.f32.mrb[0].mxu0
      %798 = vmatprep.mubr.bf16.mxu0 0
      %799 = vmatmul.mubr.bf16.gmra.mrb[0].mxu0 %v726
      %v800 = vpop.f32.mrb[0].mxu0
      %v801 = vadd.f32 %v555, %v800
      %v802 = vpop.f32.mrb[0].mxu0
      %v803 = vpop.f32.mrb[0].mxu0
      %v804 = vadd.f32 %v560, %v803
      %v805 = vpop.f32.mrb[0].mxu0
      %806 = vmatprep.mubr.bf16.mxu0 0
      %807 = vmatmul.mubr.bf16.gmra.mrb[0].mxu0 %v729
      %v808 = vpop.f32.mrb[0].mxu0
      %v809 = vadd.f32 %v565, %v808
      %v810 = vpop.f32.mrb[0].mxu0
      %v811 = vpop.f32.mrb[0].mxu0
      %v812 = vadd.f32 %v570, %v811
      %v813 = vpop.f32.mrb[0].mxu0
      %814 = vmatprep.mubr.bf16.mxu0 0
      %815 = vmatmul.mubr.bf16.gmra.mrb[0].mxu0 %v732
      %v816 = vpop.f32.mrb[0].mxu0
      %v817 = vadd.f32 %v575, %v816
      %v818 = vpop.f32.mrb[0].mxu0
      %v819 = vpop.f32.mrb[0].mxu0
      %v820 = vadd.f32 %v580, %v819
      %v821 = vpop.f32.mrb[0].mxu0
      %822 = vmatprep.mubr.bf16.mxu0 0
      %823 = vmatmul.mubr.bf16.gmra.mrb[0].mxu0 %v735
      %v824 = vpop.f32.mrb[0].mxu0
      %v825 = vadd.f32 %v585, %v824
      %v826 = vpop.f32.mrb[0].mxu0
      %v827 = vpop.f32.mrb[0].mxu0
      %v828 = vadd.f32 %v590, %v827
      %v829 = vpop.f32.mrb[0].mxu0
      %830 = vmatprep.mubr.bf16.mxu0 0
      %831 = vmatmul.mubr.bf16.gmra.mrb[0].mxu0 %v738
      %v832 = vpop.f32.mrb[0].mxu0
      %v833 = vadd.f32 %v595, %v832
      %v834 = vpop.f32.mrb[0].mxu0
      %v835 = vpop.f32.mrb[0].mxu0
      %v836 = vadd.f32 %v600, %v835
      %v837 = vpop.f32.mrb[0].mxu0
      %838 = vmatprep.mubr.bf16.mxu0 0
      %839 = vmatmul.mubr.bf16.gmra.mrb[0].mxu0 %v741
      %v840 = vpop.f32.mrb[0].mxu0
      %v841 = vadd.f32 %v605, %v840
      %v842 = vpop.f32.mrb[0].mxu0
      %v843 = vpop.f32.mrb[0].mxu0
      %v844 = vadd.f32 %v610, %v843
      %v845 = vpop.f32.mrb[0].mxu0
      %846 = vmatprep.mubr.bf16.mxu0 0
      %847 = vmatmul.mubr.bf16.gmra.mrb[0].mxu0 %v744
      %v848 = vpop.f32.mrb[0].mxu0
      %v849 = vadd.f32 %v615, %v848
      %v850 = vpop.f32.mrb[0].mxu0
      %v851 = vpop.f32.mrb[0].mxu0
      %v852 = vadd.f32 %v620, %v851
      %v853 = vpop.f32.mrb[0].mxu0
      %854 = vmatprep.mubr.bf16.mxu0 0
      %855 = vmatmul.mubr.bf16.gmra.mrb[0].mxu0 %v747
      %v856 = vpop.f32.mrb[0].mxu0
      %v857 = vadd.f32 %v625, %v856
      %v858 = vpop.f32.mrb[0].mxu0
      %v859 = vpop.f32.mrb[0].mxu0
      %v860 = vadd.f32 %v630, %v859
      %v861 = vpop.f32.mrb[0].mxu0
      %862 = vmatprep.mubr.bf16.mxu0 0
      %863 = vmatmul.mubr.bf16.gmra.mrb[0].mxu0 %v750
      %v864 = vpop.f32.mrb[0].mxu0
      %v865 = vadd.f32 %v635, %v864
      %v866 = vpop.f32.mrb[0].mxu0
      %v867 = vpop.f32.mrb[0].mxu0
      %v868 = vadd.f32 %v640, %v867
      %v869 = vpop.f32.mrb[0].mxu0
      %870 = vmatprep.mubr.bf16.mxu0 0
      %871 = vmatmul.mubr.bf16.gmra.mrb[0].mxu0 %v753
      %v872 = vpop.f32.mrb[0].mxu0
      %v873 = vadd.f32 %v645, %v872
      %v874 = vpop.f32.mrb[0].mxu0
      %v875 = vpop.f32.mrb[0].mxu0
      %v876 = vadd.f32 %v650, %v875
      %v877 = vpop.f32.mrb[0].mxu0
      %878 = vmatprep.mubr.bf16.mxu0 0
      %879 = vmatmul.mubr.bf16.gmra.mrb[0].mxu0 %v756
      %v880 = vpop.f32.mrb[0].mxu0
      %v881 = vadd.f32 %v655, %v880
      %v882 = vpop.f32.mrb[0].mxu0
      %v883 = vpop.f32.mrb[0].mxu0
      %v884 = vadd.f32 %v660, %v883
      %v885 = vpop.f32.mrb[0].mxu0
      %886 = vdwg.mxu0
      %v887 = vpack.c.bf16 %v796, %v793
      %v888 = vpack.c.bf16 %v804, %v801
      %v889 = vpack.c.bf16 %v812, %v809
      %v890 = vpack.c.bf16 %v820, %v817
      %v892 = vsel %vm337, %v325, 0
      %v895 = vsel %vm337, %v326, 0
      %v898 = vsel %vm337, %v327, 0
      %v901 = vsel %vm337, %v328, 0
      %v904 = vsel %vm337, %v887, 0
      %v907 = vsel %vm337, %v888, 0
      %v910 = vsel %vm337, %v889, 0
      %v913 = vsel %vm337, %v890, 0
      %915 = vmatprep.subr.bf16.mxu0 0
      %916 = vmatpush1.bf16.xpose.msra.mxu0 %v904
      %917 = vmatprep.subr.bf16.mxu0 0
      %918 = vmatpush1.bf16.xpose.msra.mxu0 %v907
      %919 = vmatprep.subr.bf16.mxu0 0
      %920 = vmatpush1.bf16.xpose.msra.mxu0 %v910
      %921 = vmatprep.subr.bf16.mxu0 0
      %922 = vmatpush1.bf16.xpose.msra.mxu0 %v913
      %923 = vmatprep.subr.bf16.mxu0 0
      %924 = vmatpush1.bf16.xpose.msra.mxu0 0
      %925 = vmatprep.subr.bf16.mxu0 0
      %926 = vmatpush1.bf16.xpose.msra.mxu0 0
      %927 = vmatprep.subr.bf16.mxu0 0
      %928 = vmatpush1.bf16.xpose.msra.mxu0 0
      %929 = vmatprep.subr.bf16.mxu0 0
      %930 = vmatpush1.bf16.xpose.msra.mxu0 0
      %931 = vmatprep.subr.bf16.mxu0 0
      %932 = vmatpush1.bf16.xpose.msra.mxu0 0
      %933 = vmatprep.subr.bf16.mxu0 0
      %934 = vmatpush1.bf16.xpose.msra.mxu0 0
      %935 = vmatprep.subr.bf16.mxu0 0
      %936 = vmatpush1.bf16.xpose.msra.mxu0 0
      %937 = vmatprep.subr.bf16.mxu0 0
      %938 = vmatpush1.bf16.xpose.msra.mxu0 0
      %939 = vmatprep.subr.bf16.mxu0 0
      %940 = vmatpush1.bf16.xpose.msra.mxu0 0
      %941 = vmatprep.subr.bf16.mxu0 0
      %942 = vmatpush1.bf16.xpose.msra.mxu0 0
      %943 = vmatprep.subr.bf16.mxu0 0
      %944 = vmatpush1.bf16.xpose.msra.mxu0 0
      %945 = vmatprep.subr.bf16.mxu0 0
      %946 = vmatpush1.bf16.xpose.msra.mxu0 0
      %947 = vmatprep.mubr.bf16.mxu0 0
      %948 = vmatmul.mubr.bf16.gmra.mrb[0].mxu0 %v892
      %v949 = vpop.f32.mrb[0].mxu0
      %v950 = vadd.f32 0.0, %v949
      %v951 = vpop.f32.mrb[0].mxu0
      %v952 = vpop.f32.mrb[0].mxu0
      %v953 = vadd.f32 0.0, %v952
      %v954 = vpop.f32.mrb[0].mxu0
      %955 = vmatprep.mubr.bf16.mxu0 0
      %956 = vmatmul.mubr.bf16.gmra.mrb[0].mxu0 %v895
      %v957 = vpop.f32.mrb[0].mxu0
      %v958 = vadd.f32 0.0, %v957
      %v959 = vpop.f32.mrb[0].mxu0
      %v960 = vpop.f32.mrb[0].mxu0
      %v961 = vadd.f32 0.0, %v960
      %v962 = vpop.f32.mrb[0].mxu0
      %963 = vmatprep.mubr.bf16.mxu0 0
      %964 = vmatmul.mubr.bf16.gmra.mrb[0].mxu0 %v898
      %v965 = vpop.f32.mrb[0].mxu0
      %v966 = vadd.f32 0.0, %v965
      %v967 = vpop.f32.mrb[0].mxu0
      %v968 = vpop.f32.mrb[0].mxu0
      %v969 = vadd.f32 0.0, %v968
      %v970 = vpop.f32.mrb[0].mxu0
      %971 = vmatprep.mubr.bf16.mxu0 0
      %972 = vmatmul.mubr.bf16.gmra.mrb[0].mxu0 %v901
      %v973 = vpop.f32.mrb[0].mxu0
      %v974 = vadd.f32 0.0, %v973
      %v975 = vpop.f32.mrb[0].mxu0
      %v976 = vpop.f32.mrb[0].mxu0
      %v977 = vadd.f32 0.0, %v976
      %v978 = vpop.f32.mrb[0].mxu0
      %979 = vdwg.mxu0
      %981 = vset.pattern.permute.xlu0 0
      %982 = vperm.xlu0 %981, %v282
      %v983 = vpop.permute.xlu0 %982
      %986 = vset.pattern.permute.xlu0 0
      %987 = vperm.xlu0 %986, %v283
      %v988 = vpop.permute.xlu0 %987
      %991 = vset.pattern.permute.xlu0 0
      %992 = vperm.xlu0 %991, %v284
      %v993 = vpop.permute.xlu0 %992
      %996 = vset.pattern.permute.xlu0 0
      %997 = vperm.xlu0 %996, %v285
      %v998 = vpop.permute.xlu0 %997
      %1001 = vset.pattern.permute.xlu0 0
      %1002 = vperm.xlu0 %1001, %v286
      %v1003 = vpop.permute.xlu0 %1002
      %1006 = vset.pattern.permute.xlu0 0
      %1007 = vperm.xlu0 %1006, %v287
      %v1008 = vpop.permute.xlu0 %1007
      %1011 = vset.pattern.permute.xlu0 0
      %1012 = vperm.xlu0 %1011, %v288
      %v1013 = vpop.permute.xlu0 %1012
      %1016 = vset.pattern.permute.xlu0 0
      %1017 = vperm.xlu0 %1016, %v289
      %v1018 = vpop.permute.xlu0 %1017
      %v1020 = vadd.f32 %v329, %v983
      %v1021 = vadd.f32 %v330, %v988
      %v1022 = vadd.f32 %v331, %v993
      %v1023 = vadd.f32 %v332, %v998
      %v1024 = vadd.f32 %v333, %v1003
      %v1025 = vadd.f32 %v334, %v1008
      %v1026 = vadd.f32 %v335, %v1013
      %v1027 = vadd.f32 %v336, %v1018
      %v1028 = vpack.c.bf16 %v953, %v950
      %v1029 = vpack.c.bf16 %v961, %v958
      %v1030 = vpack.c.bf16 %v969, %v966
      %v1031 = vpack.c.bf16 %v977, %v974
      %v1032 = vpack.c.bf16 %v828, %v825
      %v1033 = vpack.c.bf16 %v860, %v857
      %vm1034 = vcmask 130048
      %v1036 = vsel %vm1034, %v1028, 0
      %v1039 = vsel %vm1034, %v1029, 0
      %v1042 = vsel %vm1034, %v1030, 0
      %v1045 = vsel %vm1034, %v1031, 0
      %1047 = vmatprep.subr.bf16.mxu0 0
      %1048 = vmatpush1.bf16.msra.mxu0 %v1032
      %1049 = vmatprep.subr.bf16.mxu0 0
      %1050 = vmatpush1.bf16.msra.mxu0 0
      %1051 = vmatprep.subr.bf16.mxu0 0
      %1052 = vmatpush1.bf16.msra.mxu0 0
      %1053 = vmatprep.subr.bf16.mxu0 0
      %1054 = vmatpush1.bf16.msra.mxu0 0
      %1055 = vmatprep.subr.bf16.mxu0 0
      %1056 = vmatpush1.bf16.msra.mxu0 0
      %1057 = vmatprep.subr.bf16.mxu0 0
      %1058 = vmatpush1.bf16.msra.mxu0 0
      %1059 = vmatprep.subr.bf16.mxu0 0
      %1060 = vmatpush1.bf16.msra.mxu0 0
      %1061 = vmatprep.subr.bf16.mxu0 0
      %1062 = vmatpush1.bf16.msra.mxu0 0
      %1063 = vmatprep.subr.bf16.mxu0 0
      %1064 = vmatpush1.bf16.msra.mxu0 0
      %1065 = vmatprep.subr.bf16.mxu0 0
      %1066 = vmatpush1.bf16.msra.mxu0 0
      %1067 = vmatprep.subr.bf16.mxu0 0
      %1068 = vmatpush1.bf16.msra.mxu0 0
      %1069 = vmatprep.subr.bf16.mxu0 0
      %1070 = vmatpush1.bf16.msra.mxu0 0
      %1071 = vmatprep.subr.bf16.mxu0 0
      %1072 = vmatpush1.bf16.msra.mxu0 0
      %1073 = vmatprep.subr.bf16.mxu0 0
      %1074 = vmatpush1.bf16.msra.mxu0 0
      %1075 = vmatprep.subr.bf16.mxu0 0
      %1076 = vmatpush1.bf16.msra.mxu0 0
      %1077 = vmatprep.subr.bf16.mxu0 0
      %1078 = vmatpush1.bf16.msra.mxu0 0
      %1079 = vmatprep.mubr.bf16.mxu0 0
      %1080 = vmatmul.mubr.bf16.gmra.mrb[0].mxu0 %v1036
      %v1081 = vpop.f32.mrb[0].mxu0
      %v1082 = vadd.f32 0.0, %v1081
      %v1083 = vpop.f32.mrb[0].mxu0
      %v1084 = vpop.f32.mrb[0].mxu0
      %v1085 = vadd.f32 0.0, %v1084
      %v1086 = vpop.f32.mrb[0].mxu0
      %1087 = vmatprep.mubr.bf16.mxu0 0
      %1088 = vmatmul.mubr.bf16.gmra.mrb[0].mxu0 %v1039
      %v1089 = vpop.f32.mrb[0].mxu0
      %v1090 = vadd.f32 0.0, %v1089
      %v1091 = vpop.f32.mrb[0].mxu0
      %v1092 = vpop.f32.mrb[0].mxu0
      %v1093 = vadd.f32 0.0, %v1092
      %v1094 = vpop.f32.mrb[0].mxu0
      %1095 = vmatprep.mubr.bf16.mxu0 0
      %1096 = vmatmul.mubr.bf16.gmra.mrb[0].mxu0 %v1042
      %v1097 = vpop.f32.mrb[0].mxu0
      %v1098 = vadd.f32 0.0, %v1097
      %v1099 = vpop.f32.mrb[0].mxu0
      %v1100 = vpop.f32.mrb[0].mxu0
      %v1101 = vadd.f32 0.0, %v1100
      %v1102 = vpop.f32.mrb[0].mxu0
      %1103 = vmatprep.mubr.bf16.mxu0 0
      %1104 = vmatmul.mubr.bf16.gmra.mrb[0].mxu0 %v1045
      %v1105 = vpop.f32.mrb[0].mxu0
      %v1106 = vadd.f32 0.0, %v1105
      %v1107 = vpop.f32.mrb[0].mxu0
      %v1108 = vpop.f32.mrb[0].mxu0
      %v1109 = vadd.f32 0.0, %v1108
      %v1110 = vpop.f32.mrb[0].mxu0
      %1111 = vdwg.mxu0
      %v1112 = vsel %vm337, %v1082, -inf
      %1113 = vmax.xlane.f32.xlu0 %v1112
      %v1114 = vpop.xlane.xlu0 %1113
      %v1115 = vsel %vm337, %v1085, -inf
      %1116 = vmax.xlane.f32.xlu0 %v1115
      %v1117 = vpop.xlane.xlu0 %1116
      %v1118 = vsel %vm337, %v1090, -inf
      %1119 = vmax.xlane.f32.xlu0 %v1118
      %v1120 = vpop.xlane.xlu0 %1119
      %v1121 = vsel %vm337, %v1093, -inf
      %1122 = vmax.xlane.f32.xlu0 %v1121
      %v1123 = vpop.xlane.xlu0 %1122
      %v1124 = vsel %vm337, %v1098, -inf
      %1125 = vmax.xlane.f32.xlu0 %v1124
      %v1126 = vpop.xlane.xlu0 %1125
      %v1127 = vsel %vm337, %v1101, -inf
      %1128 = vmax.xlane.f32.xlu0 %v1127
      %v1129 = vpop.xlane.xlu0 %1128
      %v1130 = vsel %vm337, %v1106, -inf
      %1131 = vmax.xlane.f32.xlu0 %v1130
      %v1132 = vpop.xlane.xlu0 %1131
      %v1133 = vsel %vm337, %v1109, -inf
      %1134 = vmax.xlane.f32.xlu0 %v1133
      %v1135 = vpop.xlane.xlu0 %1134
      %v1136 = vsub.f32 %v1082, %v1114
      %v1137 = vsub.f32 %v1085, %v1117
      %v1138 = vsub.f32 %v1090, %v1120
      %v1139 = vsub.f32 %v1093, %v1123
      %v1140 = vsub.f32 %v1098, %v1126
      %v1141 = vsub.f32 %v1101, %v1129
      %v1142 = vsub.f32 %v1106, %v1132
      %v1143 = vsub.f32 %v1109, %v1135
      %v1144 = vmul.f32 %v1136, 1.442695
      %v1145 = vpow.pop %v1144
      %v1146 = vmul.f32 %v1137, 1.442695
      %v1147 = vpow.pop %v1146
      %v1148 = vmul.f32 %v1138, 1.442695
      %v1149 = vpow.pop %v1148
      %v1150 = vmul.f32 %v1139, 1.442695
      %v1151 = vpow.pop %v1150
      %v1152 = vmul.f32 %v1140, 1.442695
      %v1153 = vpow.pop %v1152
      %v1154 = vmul.f32 %v1141, 1.442695
      %v1155 = vpow.pop %v1154
      %v1156 = vmul.f32 %v1142, 1.442695
      %v1157 = vpow.pop %v1156
      %v1158 = vmul.f32 %v1143, 1.442695
      %v1159 = vpow.pop %v1158
      %v1160 = vsel %vm337, %v1145, 0.0
      %1161 = vadd.xlane.f32.xlu0 %v1160
      %v1162 = vpop.xlane.xlu0 %1161
      %v1163 = vsel %vm337, %v1147, 0.0
      %1164 = vadd.xlane.f32.xlu0 %v1163
      %v1165 = vpop.xlane.xlu0 %1164
      %v1166 = vsel %vm337, %v1149, 0.0
      %1167 = vadd.xlane.f32.xlu0 %v1166
      %v1168 = vpop.xlane.xlu0 %1167
      %v1169 = vsel %vm337, %v1151, 0.0
      %1170 = vadd.xlane.f32.xlu0 %v1169
      %v1171 = vpop.xlane.xlu0 %1170
      %v1172 = vsel %vm337, %v1153, 0.0
      %1173 = vadd.xlane.f32.xlu0 %v1172
      %v1174 = vpop.xlane.xlu0 %1173
      %v1175 = vsel %vm337, %v1155, 0.0
      %1176 = vadd.xlane.f32.xlu0 %v1175
      %v1177 = vpop.xlane.xlu0 %1176
      %v1178 = vsel %vm337, %v1157, 0.0
      %1179 = vadd.xlane.f32.xlu0 %v1178
      %v1180 = vpop.xlane.xlu0 %1179
      %v1181 = vsel %vm337, %v1159, 0.0
      %1182 = vadd.xlane.f32.xlu0 %v1181
      %v1183 = vpop.xlane.xlu0 %1182
      %v1184 = vrcp.pop %v1162
      %v1185 = vrcp.pop %v1165
      %v1186 = vrcp.pop %v1168
      %v1187 = vrcp.pop %v1171
      %v1188 = vrcp.pop %v1174
      %v1189 = vrcp.pop %v1177
      %v1190 = vrcp.pop %v1180
      %v1191 = vrcp.pop %v1183
      %v1192 = vmul.f32 %v1145, %v1184
      %v1193 = vmul.f32 %v1147, %v1185
      %v1194 = vmul.f32 %v1149, %v1186
      %v1195 = vmul.f32 %v1151, %v1187
      %v1196 = vmul.f32 %v1153, %v1188
      %v1197 = vmul.f32 %v1155, %v1189
      %v1198 = vmul.f32 %v1157, %v1190
      %v1199 = vmul.f32 %v1159, %v1191
      %v1200 = vpack.c.bf16 %v1193, %v1192
      %v1201 = vpack.c.bf16 %v1195, %v1194
      %v1202 = vpack.c.bf16 %v1197, %v1196
      %v1203 = vpack.c.bf16 %v1199, %v1198
      %v1205 = vsel %vm337, %v1033, 0
      %v1208 = vsel %vm337, %v1200, 0
      %v1211 = vsel %vm337, %v1201, 0
      %v1214 = vsel %vm337, %v1202, 0
      %v1217 = vsel %vm337, %v1203, 0
      %1219 = vmatprep.subr.bf16.mxu0 0
      %1220 = vmatpush1.bf16.xpose.msra.mxu0 %v1208
      %1221 = vmatprep.subr.bf16.mxu0 0
      %1222 = vmatpush1.bf16.xpose.msra.mxu0 %v1211
      %1223 = vmatprep.subr.bf16.mxu0 0
      %1224 = vmatpush1.bf16.xpose.msra.mxu0 %v1214
      %1225 = vmatprep.subr.bf16.mxu0 0
      %1226 = vmatpush1.bf16.xpose.msra.mxu0 %v1217
      %1227 = vmatprep.subr.bf16.mxu0 0
      %1228 = vmatpush1.bf16.xpose.msra.mxu0 0
      %1229 = vmatprep.subr.bf16.mxu0 0
      %1230 = vmatpush1.bf16.xpose.msra.mxu0 0
      %1231 = vmatprep.subr.bf16.mxu0 0
      %1232 = vmatpush1.bf16.xpose.msra.mxu0 0
      %1233 = vmatprep.subr.bf16.mxu0 0
      %1234 = vmatpush1.bf16.xpose.msra.mxu0 0
      %1235 = vmatprep.subr.bf16.mxu0 0
      %1236 = vmatpush1.bf16.xpose.msra.mxu0 0
      %1237 = vmatprep.subr.bf16.mxu0 0
      %1238 = vmatpush1.bf16.xpose.msra.mxu0 0
      %1239 = vmatprep.subr.bf16.mxu0 0
      %1240 = vmatpush1.bf16.xpose.msra.mxu0 0
      %1241 = vmatprep.subr.bf16.mxu0 0
      %1242 = vmatpush1.bf16.xpose.msra.mxu0 0
      %1243 = vmatprep.subr.bf16.mxu0 0
      %1244 = vmatpush1.bf16.xpose.msra.mxu0 0
      %1245 = vmatprep.subr.bf16.mxu0 0
      %1246 = vmatpush1.bf16.xpose.msra.mxu0 0
      %1247 = vmatprep.subr.bf16.mxu0 0
      %1248 = vmatpush1.bf16.xpose.msra.mxu0 0
      %1249 = vmatprep.subr.bf16.mxu0 0
      %1250 = vmatpush1.bf16.xpose.msra.mxu0 0
      %1251 = vmatprep.mubr.bf16.mxu0 0
      %1252 = vmatmul.mubr.bf16.gmra.mrb[0].mxu0 %v1205
      %v1253 = vpop.f32.mrb[0].mxu0
      %v1254 = vadd.f32 0.0, %v1253
      %v1255 = vpop.f32.mrb[0].mxu0
      %v1256 = vpop.f32.mrb[0].mxu0
      %v1257 = vadd.f32 0.0, %v1256
      %v1258 = vpop.f32.mrb[0].mxu0
      %1259 = vdwg.mxu0
      %v1260 = vpack.c.bf16 %v1257, %v1254
      %v1269 = vunpack.c.l.b16 %v250
      %v1270 = vunpack.c.l.b16 %v251
      %v1271 = vunpack.c.l.b16 %v252
      %v1272 = vunpack.c.l.b16 %v253
      %v1273 = vunpack.c.l.b16 %v254
      %v1274 = vunpack.c.l.b16 %v255
      %v1275 = vunpack.c.l.b16 %v256
      %v1276 = vunpack.c.l.b16 %v257
      %v1277 = vpack.c.b16 %v1270, %v1269
      %v1278 = vpack.c.b16 %v1272, %v1271
      %v1279 = vpack.c.b16 %v1274, %v1273
      %v1280 = vpack.c.b16 %v1276, %v1275
      %v1282 = vsel %vm1034, %v1277, 0
      %v1285 = vsel %vm1034, %v1278, 0
      %v1288 = vsel %vm1034, %v1279, 0
      %v1291 = vsel %vm1034, %v1280, 0
      %1293 = vmatprep.subr.bf16.mxu0 0
      %1294 = vmatpush1.bf16.msra.mxu0 %v1260
      %1295 = vmatprep.subr.bf16.mxu0 0
      %1296 = vmatpush1.bf16.msra.mxu0 0
      %1297 = vmatprep.subr.bf16.mxu0 0
      %1298 = vmatpush1.bf16.msra.mxu0 0
      %1299 = vmatprep.subr.bf16.mxu0 0
      %1300 = vmatpush1.bf16.msra.mxu0 0
      %1301 = vmatprep.subr.bf16.mxu0 0
      %1302 = vmatpush1.bf16.msra.mxu0 0
      %1303 = vmatprep.subr.bf16.mxu0 0
      %1304 = vmatpush1.bf16.msra.mxu0 0
      %1305 = vmatprep.subr.bf16.mxu0 0
      %1306 = vmatpush1.bf16.msra.mxu0 0
      %1307 = vmatprep.subr.bf16.mxu0 0
      %1308 = vmatpush1.bf16.msra.mxu0 0
      %1309 = vmatprep.subr.bf16.mxu0 0
      %1310 = vmatpush1.bf16.msra.mxu0 0
      %1311 = vmatprep.subr.bf16.mxu0 0
      %1312 = vmatpush1.bf16.msra.mxu0 0
      %1313 = vmatprep.subr.bf16.mxu0 0
      %1314 = vmatpush1.bf16.msra.mxu0 0
      %1315 = vmatprep.subr.bf16.mxu0 0
      %1316 = vmatpush1.bf16.msra.mxu0 0
      %1317 = vmatprep.subr.bf16.mxu0 0
      %1318 = vmatpush1.bf16.msra.mxu0 0
      %1319 = vmatprep.subr.bf16.mxu0 0
      %1320 = vmatpush1.bf16.msra.mxu0 0
      %1321 = vmatprep.subr.bf16.mxu0 0
      %1322 = vmatpush1.bf16.msra.mxu0 0
      %1323 = vmatprep.subr.bf16.mxu0 0
      %1324 = vmatpush1.bf16.msra.mxu0 0
      %1325 = vmatprep.mubr.bf16.mxu0 0
      %1326 = vmatmul.mubr.bf16.gmra.mrb[0].mxu0 %v1282
      %v1327 = vpop.f32.mrb[0].mxu0
      %v1328 = vadd.f32 0.0, %v1327
      %v1329 = vpop.f32.mrb[0].mxu0
      %v1330 = vpop.f32.mrb[0].mxu0
      %v1331 = vadd.f32 0.0, %v1330
      %v1332 = vpop.f32.mrb[0].mxu0
      %1333 = vmatprep.mubr.bf16.mxu0 0
      %1334 = vmatmul.mubr.bf16.gmra.mrb[0].mxu0 %v1285
      %v1335 = vpop.f32.mrb[0].mxu0
      %v1336 = vadd.f32 0.0, %v1335
      %v1337 = vpop.f32.mrb[0].mxu0
      %v1338 = vpop.f32.mrb[0].mxu0
      %v1339 = vadd.f32 0.0, %v1338
      %v1340 = vpop.f32.mrb[0].mxu0
      %1341 = vmatprep.mubr.bf16.mxu0 0
      %1342 = vmatmul.mubr.bf16.gmra.mrb[0].mxu0 %v1288
      %v1343 = vpop.f32.mrb[0].mxu0
      %v1344 = vadd.f32 0.0, %v1343
      %v1345 = vpop.f32.mrb[0].mxu0
      %v1346 = vpop.f32.mrb[0].mxu0
      %v1347 = vadd.f32 0.0, %v1346
      %v1348 = vpop.f32.mrb[0].mxu0
      %1349 = vmatprep.mubr.bf16.mxu0 0
      %1350 = vmatmul.mubr.bf16.gmra.mrb[0].mxu0 %v1291
      %v1351 = vpop.f32.mrb[0].mxu0
      %v1352 = vadd.f32 0.0, %v1351
      %v1353 = vpop.f32.mrb[0].mxu0
      %v1354 = vpop.f32.mrb[0].mxu0
      %v1355 = vadd.f32 0.0, %v1354
      %v1356 = vpop.f32.mrb[0].mxu0
      %1357 = vdwg.mxu0
      %v1358 = vadd.f32 %v1020, %v1328
      %v1359 = vadd.f32 %v1021, %v1331
      %v1360 = vadd.f32 %v1022, %v1336
      %v1361 = vadd.f32 %v1023, %v1339
      %v1362 = vadd.f32 %v1024, %v1344
      %v1363 = vadd.f32 %v1025, %v1347
      %v1364 = vadd.f32 %v1026, %v1352
      %v1365 = vadd.f32 %v1027, %v1355
      %v1366 = vpack.c.bf16 %v836, %v833
      %v1367 = vpack.c.bf16 %v868, %v865
      %1372 = vrot.lane.b32.xlu0 %v1028, 112
      %v1373 = vpop.permute.xlu0 %1372
      %1374 = vrot.lane.b32.xlu0 %v1029, 112
      %v1375 = vpop.permute.xlu0 %1374
      %1376 = vrot.lane.b32.xlu0 %v1030, 112
      %v1377 = vpop.permute.xlu0 %1376
      %1378 = vrot.lane.b32.xlu0 %v1031, 112
      %v1379 = vpop.permute.xlu0 %1378
      %v1381 = vsel %vm1034, %v1373, 0
      %v1384 = vsel %vm1034, %v1375, 0
      %v1387 = vsel %vm1034, %v1377, 0
      %v1390 = vsel %vm1034, %v1379, 0
      %1392 = vmatprep.subr.bf16.mxu0 0
      %1393 = vmatpush1.bf16.msra.mxu0 %v1366
      %1394 = vmatprep.subr.bf16.mxu0 0
      %1395 = vmatpush1.bf16.msra.mxu0 0
      %1396 = vmatprep.subr.bf16.mxu0 0
      %1397 = vmatpush1.bf16.msra.mxu0 0
      %1398 = vmatprep.subr.bf16.mxu0 0
      %1399 = vmatpush1.bf16.msra.mxu0 0
      %1400 = vmatprep.subr.bf16.mxu0 0
      %1401 = vmatpush1.bf16.msra.mxu0 0
      %1402 = vmatprep.subr.bf16.mxu0 0
      %1403 = vmatpush1.bf16.msra.mxu0 0
      %1404 = vmatprep.subr.bf16.mxu0 0
      %1405 = vmatpush1.bf16.msra.mxu0 0
      %1406 = vmatprep.subr.bf16.mxu0 0
      %1407 = vmatpush1.bf16.msra.mxu0 0
      %1408 = vmatprep.subr.bf16.mxu0 0
      %1409 = vmatpush1.bf16.msra.mxu0 0
      %1410 = vmatprep.subr.bf16.mxu0 0
      %1411 = vmatpush1.bf16.msra.mxu0 0
      %1412 = vmatprep.subr.bf16.mxu0 0
      %1413 = vmatpush1.bf16.msra.mxu0 0
      %1414 = vmatprep.subr.bf16.mxu0 0
      %1415 = vmatpush1.bf16.msra.mxu0 0
      %1416 = vmatprep.subr.bf16.mxu0 0
      %1417 = vmatpush1.bf16.msra.mxu0 0
      %1418 = vmatprep.subr.bf16.mxu0 0
      %1419 = vmatpush1.bf16.msra.mxu0 0
      %1420 = vmatprep.subr.bf16.mxu0 0
      %1421 = vmatpush1.bf16.msra.mxu0 0
      %1422 = vmatprep.subr.bf16.mxu0 0
      %1423 = vmatpush1.bf16.msra.mxu0 0
      %1424 = vmatprep.mubr.bf16.mxu0 0
      %1425 = vmatmul.mubr.bf16.gmra.mrb[0].mxu0 %v1381
      %v1426 = vpop.f32.mrb[0].mxu0
      %v1427 = vadd.f32 0.0, %v1426
      %v1428 = vpop.f32.mrb[0].mxu0
      %v1429 = vpop.f32.mrb[0].mxu0
      %v1430 = vadd.f32 0.0, %v1429
      %v1431 = vpop.f32.mrb[0].mxu0
      %1432 = vmatprep.mubr.bf16.mxu0 0
      %1433 = vmatmul.mubr.bf16.gmra.mrb[0].mxu0 %v1384
      %v1434 = vpop.f32.mrb[0].mxu0
      %v1435 = vadd.f32 0.0, %v1434
      %v1436 = vpop.f32.mrb[0].mxu0
      %v1437 = vpop.f32.mrb[0].mxu0
      %v1438 = vadd.f32 0.0, %v1437
      %v1439 = vpop.f32.mrb[0].mxu0
      %1440 = vmatprep.mubr.bf16.mxu0 0
      %1441 = vmatmul.mubr.bf16.gmra.mrb[0].mxu0 %v1387
      %v1442 = vpop.f32.mrb[0].mxu0
      %v1443 = vadd.f32 0.0, %v1442
      %v1444 = vpop.f32.mrb[0].mxu0
      %v1445 = vpop.f32.mrb[0].mxu0
      %v1446 = vadd.f32 0.0, %v1445
      %v1447 = vpop.f32.mrb[0].mxu0
      %1448 = vmatprep.mubr.bf16.mxu0 0
      %1449 = vmatmul.mubr.bf16.gmra.mrb[0].mxu0 %v1390
      %v1450 = vpop.f32.mrb[0].mxu0
      %v1451 = vadd.f32 0.0, %v1450
      %v1452 = vpop.f32.mrb[0].mxu0
      %v1453 = vpop.f32.mrb[0].mxu0
      %v1454 = vadd.f32 0.0, %v1453
      %v1455 = vpop.f32.mrb[0].mxu0
      %1456 = vdwg.mxu0
      %v1457 = vsel %vm337, %v1427, -inf
      %1458 = vmax.xlane.f32.xlu0 %v1457
      %v1459 = vpop.xlane.xlu0 %1458
      %v1460 = vsel %vm337, %v1430, -inf
      %1461 = vmax.xlane.f32.xlu0 %v1460
      %v1462 = vpop.xlane.xlu0 %1461
      %v1463 = vsel %vm337, %v1435, -inf
      %1464 = vmax.xlane.f32.xlu0 %v1463
      %v1465 = vpop.xlane.xlu0 %1464
      %v1466 = vsel %vm337, %v1438, -inf
      %1467 = vmax.xlane.f32.xlu0 %v1466
      %v1468 = vpop.xlane.xlu0 %1467
      %v1469 = vsel %vm337, %v1443, -inf
      %1470 = vmax.xlane.f32.xlu0 %v1469
      %v1471 = vpop.xlane.xlu0 %1470
      %v1472 = vsel %vm337, %v1446, -inf
      %1473 = vmax.xlane.f32.xlu0 %v1472
      %v1474 = vpop.xlane.xlu0 %1473
      %v1475 = vsel %vm337, %v1451, -inf
      %1476 = vmax.xlane.f32.xlu0 %v1475
      %v1477 = vpop.xlane.xlu0 %1476
      %v1478 = vsel %vm337, %v1454, -inf
      %1479 = vmax.xlane.f32.xlu0 %v1478
      %v1480 = vpop.xlane.xlu0 %1479
      %v1481 = vsub.f32 %v1427, %v1459
      %v1482 = vsub.f32 %v1430, %v1462
      %v1483 = vsub.f32 %v1435, %v1465
      %v1484 = vsub.f32 %v1438, %v1468
      %v1485 = vsub.f32 %v1443, %v1471
      %v1486 = vsub.f32 %v1446, %v1474
      %v1487 = vsub.f32 %v1451, %v1477
      %v1488 = vsub.f32 %v1454, %v1480
      %v1489 = vmul.f32 %v1481, 1.442695
      %v1490 = vpow.pop %v1489
      %v1491 = vmul.f32 %v1482, 1.442695
      %v1492 = vpow.pop %v1491
      %v1493 = vmul.f32 %v1483, 1.442695
      %v1494 = vpow.pop %v1493
      %v1495 = vmul.f32 %v1484, 1.442695
      %v1496 = vpow.pop %v1495
      %v1497 = vmul.f32 %v1485, 1.442695
      %v1498 = vpow.pop %v1497
      %v1499 = vmul.f32 %v1486, 1.442695
      %v1500 = vpow.pop %v1499
      %v1501 = vmul.f32 %v1487, 1.442695
      %v1502 = vpow.pop %v1501
      %v1503 = vmul.f32 %v1488, 1.442695
      %v1504 = vpow.pop %v1503
      %v1505 = vsel %vm337, %v1490, 0.0
      %1506 = vadd.xlane.f32.xlu0 %v1505
      %v1507 = vpop.xlane.xlu0 %1506
      %v1508 = vsel %vm337, %v1492, 0.0
      %1509 = vadd.xlane.f32.xlu0 %v1508
      %v1510 = vpop.xlane.xlu0 %1509
      %v1511 = vsel %vm337, %v1494, 0.0
      %1512 = vadd.xlane.f32.xlu0 %v1511
      %v1513 = vpop.xlane.xlu0 %1512
      %v1514 = vsel %vm337, %v1496, 0.0
      %1515 = vadd.xlane.f32.xlu0 %v1514
      %v1516 = vpop.xlane.xlu0 %1515
      %v1517 = vsel %vm337, %v1498, 0.0
      %1518 = vadd.xlane.f32.xlu0 %v1517
      %v1519 = vpop.xlane.xlu0 %1518
      %v1520 = vsel %vm337, %v1500, 0.0
      %1521 = vadd.xlane.f32.xlu0 %v1520
      %v1522 = vpop.xlane.xlu0 %1521
      %v1523 = vsel %vm337, %v1502, 0.0
      %1524 = vadd.xlane.f32.xlu0 %v1523
      %v1525 = vpop.xlane.xlu0 %1524
      %v1526 = vsel %vm337, %v1504, 0.0
      %1527 = vadd.xlane.f32.xlu0 %v1526
      %v1528 = vpop.xlane.xlu0 %1527
      %v1529 = vrcp.pop %v1507
      %v1530 = vrcp.pop %v1510
      %v1531 = vrcp.pop %v1513
      %v1532 = vrcp.pop %v1516
      %v1533 = vrcp.pop %v1519
      %v1534 = vrcp.pop %v1522
      %v1535 = vrcp.pop %v1525
      %v1536 = vrcp.pop %v1528
      %v1537 = vmul.f32 %v1490, %v1529
      %v1538 = vmul.f32 %v1492, %v1530
      %v1539 = vmul.f32 %v1494, %v1531
      %v1540 = vmul.f32 %v1496, %v1532
      %v1541 = vmul.f32 %v1498, %v1533
      %v1542 = vmul.f32 %v1500, %v1534
      %v1543 = vmul.f32 %v1502, %v1535
      %v1544 = vmul.f32 %v1504, %v1536
      %v1545 = vpack.c.bf16 %v1538, %v1537
      %v1546 = vpack.c.bf16 %v1540, %v1539
      %v1547 = vpack.c.bf16 %v1542, %v1541
      %v1548 = vpack.c.bf16 %v1544, %v1543
      %v1550 = vsel %vm337, %v1367, 0
      %v1553 = vsel %vm337, %v1545, 0
      %v1556 = vsel %vm337, %v1546, 0
      %v1559 = vsel %vm337, %v1547, 0
      %v1562 = vsel %vm337, %v1548, 0
      %1564 = vmatprep.subr.bf16.mxu0 0
      %1565 = vmatpush1.bf16.xpose.msra.mxu0 %v1553
      %1566 = vmatprep.subr.bf16.mxu0 0
      %1567 = vmatpush1.bf16.xpose.msra.mxu0 %v1556
      %1568 = vmatprep.subr.bf16.mxu0 0
      %1569 = vmatpush1.bf16.xpose.msra.mxu0 %v1559
      %1570 = vmatprep.subr.bf16.mxu0 0
      %1571 = vmatpush1.bf16.xpose.msra.mxu0 %v1562
      %1572 = vmatprep.subr.bf16.mxu0 0
      %1573 = vmatpush1.bf16.xpose.msra.mxu0 0
      %1574 = vmatprep.subr.bf16.mxu0 0
      %1575 = vmatpush1.bf16.xpose.msra.mxu0 0
      %1576 = vmatprep.subr.bf16.mxu0 0
      %1577 = vmatpush1.bf16.xpose.msra.mxu0 0
      %1578 = vmatprep.subr.bf16.mxu0 0
      %1579 = vmatpush1.bf16.xpose.msra.mxu0 0
      %1580 = vmatprep.subr.bf16.mxu0 0
      %1581 = vmatpush1.bf16.xpose.msra.mxu0 0
      %1582 = vmatprep.subr.bf16.mxu0 0
      %1583 = vmatpush1.bf16.xpose.msra.mxu0 0
      %1584 = vmatprep.subr.bf16.mxu0 0
      %1585 = vmatpush1.bf16.xpose.msra.mxu0 0
      %1586 = vmatprep.subr.bf16.mxu0 0
      %1587 = vmatpush1.bf16.xpose.msra.mxu0 0
      %1588 = vmatprep.subr.bf16.mxu0 0
      %1589 = vmatpush1.bf16.xpose.msra.mxu0 0
      %1590 = vmatprep.subr.bf16.mxu0 0
      %1591 = vmatpush1.bf16.xpose.msra.mxu0 0
      %1592 = vmatprep.subr.bf16.mxu0 0
      %1593 = vmatpush1.bf16.xpose.msra.mxu0 0
      %1594 = vmatprep.subr.bf16.mxu0 0
      %1595 = vmatpush1.bf16.xpose.msra.mxu0 0
      %1596 = vmatprep.mubr.bf16.mxu0 0
      %1597 = vmatmul.mubr.bf16.gmra.mrb[0].mxu0 %v1550
      %v1598 = vpop.f32.mrb[0].mxu0
      %v1599 = vadd.f32 0.0, %v1598
      %v1600 = vpop.f32.mrb[0].mxu0
      %v1601 = vpop.f32.mrb[0].mxu0
      %v1602 = vadd.f32 0.0, %v1601
      %v1603 = vpop.f32.mrb[0].mxu0
      %1604 = vdwg.mxu0
      %v1605 = vpack.c.bf16 %v1602, %v1599
      %1606 = vrot.lane.b32.xlu0 %v1277, 112
      %v1607 = vpop.permute.xlu0 %1606
      %1608 = vrot.lane.b32.xlu0 %v1278, 112
      %v1609 = vpop.permute.xlu0 %1608
      %1610 = vrot.lane.b32.xlu0 %v1279, 112
      %v1611 = vpop.permute.xlu0 %1610
      %1612 = vrot.lane.b32.xlu0 %v1280, 112
      %v1613 = vpop.permute.xlu0 %1612
      %v1615 = vsel %vm1034, %v1607, 0
      %v1618 = vsel %vm1034, %v1609, 0
      %v1621 = vsel %vm1034, %v1611, 0
      %v1624 = vsel %vm1034, %v1613, 0
      %1626 = vmatprep.subr.bf16.mxu0 0
      %1627 = vmatpush1.bf16.msra.mxu0 %v1605
      %1628 = vmatprep.subr.bf16.mxu0 0
      %1629 = vmatpush1.bf16.msra.mxu0 0
      %1630 = vmatprep.subr.bf16.mxu0 0
      %1631 = vmatpush1.bf16.msra.mxu0 0
      %1632 = vmatprep.subr.bf16.mxu0 0
      %1633 = vmatpush1.bf16.msra.mxu0 0
      %1634 = vmatprep.subr.bf16.mxu0 0
      %1635 = vmatpush1.bf16.msra.mxu0 0
      %1636 = vmatprep.subr.bf16.mxu0 0
      %1637 = vmatpush1.bf16.msra.mxu0 0
      %1638 = vmatprep.subr.bf16.mxu0 0
      %1639 = vmatpush1.bf16.msra.mxu0 0
      %1640 = vmatprep.subr.bf16.mxu0 0
      %1641 = vmatpush1.bf16.msra.mxu0 0
      %1642 = vmatprep.subr.bf16.mxu0 0
      %1643 = vmatpush1.bf16.msra.mxu0 0
      %1644 = vmatprep.subr.bf16.mxu0 0
      %1645 = vmatpush1.bf16.msra.mxu0 0
      %1646 = vmatprep.subr.bf16.mxu0 0
      %1647 = vmatpush1.bf16.msra.mxu0 0
      %1648 = vmatprep.subr.bf16.mxu0 0
      %1649 = vmatpush1.bf16.msra.mxu0 0
      %1650 = vmatprep.subr.bf16.mxu0 0
      %1651 = vmatpush1.bf16.msra.mxu0 0
      %1652 = vmatprep.subr.bf16.mxu0 0
      %1653 = vmatpush1.bf16.msra.mxu0 0
      %1654 = vmatprep.subr.bf16.mxu0 0
      %1655 = vmatpush1.bf16.msra.mxu0 0
      %1656 = vmatprep.subr.bf16.mxu0 0
      %1657 = vmatpush1.bf16.msra.mxu0 0
      %1658 = vmatprep.mubr.bf16.mxu0 0
      %1659 = vmatmul.mubr.bf16.gmra.mrb[0].mxu0 %v1615
      %v1660 = vpop.f32.mrb[0].mxu0
      %v1661 = vadd.f32 0.0, %v1660
      %v1662 = vpop.f32.mrb[0].mxu0
      %v1663 = vpop.f32.mrb[0].mxu0
      %v1664 = vadd.f32 0.0, %v1663
      %v1665 = vpop.f32.mrb[0].mxu0
      %1666 = vmatprep.mubr.bf16.mxu0 0
      %1667 = vmatmul.mubr.bf16.gmra.mrb[0].mxu0 %v1618
      %v1668 = vpop.f32.mrb[0].mxu0
      %v1669 = vadd.f32 0.0, %v1668
      %v1670 = vpop.f32.mrb[0].mxu0
      %v1671 = vpop.f32.mrb[0].mxu0
      %v1672 = vadd.f32 0.0, %v1671
      %v1673 = vpop.f32.mrb[0].mxu0
      %1674 = vmatprep.mubr.bf16.mxu0 0
      %1675 = vmatmul.mubr.bf16.gmra.mrb[0].mxu0 %v1621
      %v1676 = vpop.f32.mrb[0].mxu0
      %v1677 = vadd.f32 0.0, %v1676
      %v1678 = vpop.f32.mrb[0].mxu0
      %v1679 = vpop.f32.mrb[0].mxu0
      %v1680 = vadd.f32 0.0, %v1679
      %v1681 = vpop.f32.mrb[0].mxu0
      %1682 = vmatprep.mubr.bf16.mxu0 0
      %1683 = vmatmul.mubr.bf16.gmra.mrb[0].mxu0 %v1624
      %v1684 = vpop.f32.mrb[0].mxu0
      %v1685 = vadd.f32 0.0, %v1684
      %v1686 = vpop.f32.mrb[0].mxu0
      %v1687 = vpop.f32.mrb[0].mxu0
      %v1688 = vadd.f32 0.0, %v1687
      %v1689 = vpop.f32.mrb[0].mxu0
      %1690 = vdwg.mxu0
      %v1691 = vadd.f32 %v1358, %v1661
      %v1692 = vadd.f32 %v1359, %v1664
      %v1693 = vadd.f32 %v1360, %v1669
      %v1694 = vadd.f32 %v1361, %v1672
      %v1695 = vadd.f32 %v1362, %v1677
      %v1696 = vadd.f32 %v1363, %v1680
      %v1697 = vadd.f32 %v1364, %v1685
      %v1698 = vadd.f32 %v1365, %v1688
      %v1699 = vpack.c.bf16 %v844, %v841
      %v1700 = vpack.c.bf16 %v876, %v873
      %1701 = vrot.lane.b32.xlu0 %v1028, 96
      %v1702 = vpop.permute.xlu0 %1701
      %1703 = vrot.lane.b32.xlu0 %v1029, 96
      %v1704 = vpop.permute.xlu0 %1703
      %1705 = vrot.lane.b32.xlu0 %v1030, 96
      %v1706 = vpop.permute.xlu0 %1705
      %1707 = vrot.lane.b32.xlu0 %v1031, 96
      %v1708 = vpop.permute.xlu0 %1707
      %v1710 = vsel %vm1034, %v1702, 0
      %v1713 = vsel %vm1034, %v1704, 0
      %v1716 = vsel %vm1034, %v1706, 0
      %v1719 = vsel %vm1034, %v1708, 0
      %1721 = vmatprep.subr.bf16.mxu0 0
      %1722 = vmatpush1.bf16.msra.mxu0 %v1699
      %1723 = vmatprep.subr.bf16.mxu0 0
      %1724 = vmatpush1.bf16.msra.mxu0 0
      %1725 = vmatprep.subr.bf16.mxu0 0
      %1726 = vmatpush1.bf16.msra.mxu0 0
      %1727 = vmatprep.subr.bf16.mxu0 0
      %1728 = vmatpush1.bf16.msra.mxu0 0
      %1729 = vmatprep.subr.bf16.mxu0 0
      %1730 = vmatpush1.bf16.msra.mxu0 0
      %1731 = vmatprep.subr.bf16.mxu0 0
      %1732 = vmatpush1.bf16.msra.mxu0 0
      %1733 = vmatprep.subr.bf16.mxu0 0
      %1734 = vmatpush1.bf16.msra.mxu0 0
      %1735 = vmatprep.subr.bf16.mxu0 0
      %1736 = vmatpush1.bf16.msra.mxu0 0
      %1737 = vmatprep.subr.bf16.mxu0 0
      %1738 = vmatpush1.bf16.msra.mxu0 0
      %1739 = vmatprep.subr.bf16.mxu0 0
      %1740 = vmatpush1.bf16.msra.mxu0 0
      %1741 = vmatprep.subr.bf16.mxu0 0
      %1742 = vmatpush1.bf16.msra.mxu0 0
      %1743 = vmatprep.subr.bf16.mxu0 0
      %1744 = vmatpush1.bf16.msra.mxu0 0
      %1745 = vmatprep.subr.bf16.mxu0 0
      %1746 = vmatpush1.bf16.msra.mxu0 0
      %1747 = vmatprep.subr.bf16.mxu0 0
      %1748 = vmatpush1.bf16.msra.mxu0 0
      %1749 = vmatprep.subr.bf16.mxu0 0
      %1750 = vmatpush1.bf16.msra.mxu0 0
      %1751 = vmatprep.subr.bf16.mxu0 0
      %1752 = vmatpush1.bf16.msra.mxu0 0
      %1753 = vmatprep.mubr.bf16.mxu0 0
      %1754 = vmatmul.mubr.bf16.gmra.mrb[0].mxu0 %v1710
      %v1755 = vpop.f32.mrb[0].mxu0
      %v1756 = vadd.f32 0.0, %v1755
      %v1757 = vpop.f32.mrb[0].mxu0
      %v1758 = vpop.f32.mrb[0].mxu0
      %v1759 = vadd.f32 0.0, %v1758
      %v1760 = vpop.f32.mrb[0].mxu0
      %1761 = vmatprep.mubr.bf16.mxu0 0
      %1762 = vmatmul.mubr.bf16.gmra.mrb[0].mxu0 %v1713
      %v1763 = vpop.f32.mrb[0].mxu0
      %v1764 = vadd.f32 0.0, %v1763
      %v1765 = vpop.f32.mrb[0].mxu0
      %v1766 = vpop.f32.mrb[0].mxu0
      %v1767 = vadd.f32 0.0, %v1766
      %v1768 = vpop.f32.mrb[0].mxu0
      %1769 = vmatprep.mubr.bf16.mxu0 0
      %1770 = vmatmul.mubr.bf16.gmra.mrb[0].mxu0 %v1716
      %v1771 = vpop.f32.mrb[0].mxu0
      %v1772 = vadd.f32 0.0, %v1771
      %v1773 = vpop.f32.mrb[0].mxu0
      %v1774 = vpop.f32.mrb[0].mxu0
      %v1775 = vadd.f32 0.0, %v1774
      %v1776 = vpop.f32.mrb[0].mxu0
      %1777 = vmatprep.mubr.bf16.mxu0 0
      %1778 = vmatmul.mubr.bf16.gmra.mrb[0].mxu0 %v1719
      %v1779 = vpop.f32.mrb[0].mxu0
      %v1780 = vadd.f32 0.0, %v1779
      %v1781 = vpop.f32.mrb[0].mxu0
      %v1782 = vpop.f32.mrb[0].mxu0
      %v1783 = vadd.f32 0.0, %v1782
      %v1784 = vpop.f32.mrb[0].mxu0
      %1785 = vdwg.mxu0
      %v1786 = vsel %vm337, %v1756, -inf
      %1787 = vmax.xlane.f32.xlu0 %v1786
      %v1788 = vpop.xlane.xlu0 %1787
      %v1789 = vsel %vm337, %v1759, -inf
      %1790 = vmax.xlane.f32.xlu0 %v1789
      %v1791 = vpop.xlane.xlu0 %1790
      %v1792 = vsel %vm337, %v1764, -inf
      %1793 = vmax.xlane.f32.xlu0 %v1792
      %v1794 = vpop.xlane.xlu0 %1793
      %v1795 = vsel %vm337, %v1767, -inf
      %1796 = vmax.xlane.f32.xlu0 %v1795
      %v1797 = vpop.xlane.xlu0 %1796
      %v1798 = vsel %vm337, %v1772, -inf
      %1799 = vmax.xlane.f32.xlu0 %v1798
      %v1800 = vpop.xlane.xlu0 %1799
      %v1801 = vsel %vm337, %v1775, -inf
      %1802 = vmax.xlane.f32.xlu0 %v1801
      %v1803 = vpop.xlane.xlu0 %1802
      %v1804 = vsel %vm337, %v1780, -inf
      %1805 = vmax.xlane.f32.xlu0 %v1804
      %v1806 = vpop.xlane.xlu0 %1805
      %v1807 = vsel %vm337, %v1783, -inf
      %1808 = vmax.xlane.f32.xlu0 %v1807
      %v1809 = vpop.xlane.xlu0 %1808
      %v1810 = vsub.f32 %v1756, %v1788
      %v1811 = vsub.f32 %v1759, %v1791
      %v1812 = vsub.f32 %v1764, %v1794
      %v1813 = vsub.f32 %v1767, %v1797
      %v1814 = vsub.f32 %v1772, %v1800
      %v1815 = vsub.f32 %v1775, %v1803
      %v1816 = vsub.f32 %v1780, %v1806
      %v1817 = vsub.f32 %v1783, %v1809
      %v1818 = vmul.f32 %v1810, 1.442695
      %v1819 = vpow.pop %v1818
      %v1820 = vmul.f32 %v1811, 1.442695
      %v1821 = vpow.pop %v1820
      %v1822 = vmul.f32 %v1812, 1.442695
      %v1823 = vpow.pop %v1822
      %v1824 = vmul.f32 %v1813, 1.442695
      %v1825 = vpow.pop %v1824
      %v1826 = vmul.f32 %v1814, 1.442695
      %v1827 = vpow.pop %v1826
      %v1828 = vmul.f32 %v1815, 1.442695
      %v1829 = vpow.pop %v1828
      %v1830 = vmul.f32 %v1816, 1.442695
      %v1831 = vpow.pop %v1830
      %v1832 = vmul.f32 %v1817, 1.442695
      %v1833 = vpow.pop %v1832
      %v1834 = vsel %vm337, %v1819, 0.0
      %1835 = vadd.xlane.f32.xlu0 %v1834
      %v1836 = vpop.xlane.xlu0 %1835
      %v1837 = vsel %vm337, %v1821, 0.0
      %1838 = vadd.xlane.f32.xlu0 %v1837
      %v1839 = vpop.xlane.xlu0 %1838
      %v1840 = vsel %vm337, %v1823, 0.0
      %1841 = vadd.xlane.f32.xlu0 %v1840
      %v1842 = vpop.xlane.xlu0 %1841
      %v1843 = vsel %vm337, %v1825, 0.0
      %1844 = vadd.xlane.f32.xlu0 %v1843
      %v1845 = vpop.xlane.xlu0 %1844
      %v1846 = vsel %vm337, %v1827, 0.0
      %1847 = vadd.xlane.f32.xlu0 %v1846
      %v1848 = vpop.xlane.xlu0 %1847
      %v1849 = vsel %vm337, %v1829, 0.0
      %1850 = vadd.xlane.f32.xlu0 %v1849
      %v1851 = vpop.xlane.xlu0 %1850
      %v1852 = vsel %vm337, %v1831, 0.0
      %1853 = vadd.xlane.f32.xlu0 %v1852
      %v1854 = vpop.xlane.xlu0 %1853
      %v1855 = vsel %vm337, %v1833, 0.0
      %1856 = vadd.xlane.f32.xlu0 %v1855
      %v1857 = vpop.xlane.xlu0 %1856
      %v1858 = vrcp.pop %v1836
      %v1859 = vrcp.pop %v1839
      %v1860 = vrcp.pop %v1842
      %v1861 = vrcp.pop %v1845
      %v1862 = vrcp.pop %v1848
      %v1863 = vrcp.pop %v1851
      %v1864 = vrcp.pop %v1854
      %v1865 = vrcp.pop %v1857
      %v1866 = vmul.f32 %v1819, %v1858
      %v1867 = vmul.f32 %v1821, %v1859
      %v1868 = vmul.f32 %v1823, %v1860
      %v1869 = vmul.f32 %v1825, %v1861
      %v1870 = vmul.f32 %v1827, %v1862
      %v1871 = vmul.f32 %v1829, %v1863
      %v1872 = vmul.f32 %v1831, %v1864
      %v1873 = vmul.f32 %v1833, %v1865
      %v1874 = vpack.c.bf16 %v1867, %v1866
      %v1875 = vpack.c.bf16 %v1869, %v1868
      %v1876 = vpack.c.bf16 %v1871, %v1870
      %v1877 = vpack.c.bf16 %v1873, %v1872
      %v1879 = vsel %vm337, %v1700, 0
      %v1882 = vsel %vm337, %v1874, 0
      %v1885 = vsel %vm337, %v1875, 0
      %v1888 = vsel %vm337, %v1876, 0
      %v1891 = vsel %vm337, %v1877, 0
      %1893 = vmatprep.subr.bf16.mxu0 0
      %1894 = vmatpush1.bf16.xpose.msra.mxu0 %v1882
      %1895 = vmatprep.subr.bf16.mxu0 0
      %1896 = vmatpush1.bf16.xpose.msra.mxu0 %v1885
      %1897 = vmatprep.subr.bf16.mxu0 0
      %1898 = vmatpush1.bf16.xpose.msra.mxu0 %v1888
      %1899 = vmatprep.subr.bf16.mxu0 0
      %1900 = vmatpush1.bf16.xpose.msra.mxu0 %v1891
      %1901 = vmatprep.subr.bf16.mxu0 0
      %1902 = vmatpush1.bf16.xpose.msra.mxu0 0
      %1903 = vmatprep.subr.bf16.mxu0 0
      %1904 = vmatpush1.bf16.xpose.msra.mxu0 0
      %1905 = vmatprep.subr.bf16.mxu0 0
      %1906 = vmatpush1.bf16.xpose.msra.mxu0 0
      %1907 = vmatprep.subr.bf16.mxu0 0
      %1908 = vmatpush1.bf16.xpose.msra.mxu0 0
      %1909 = vmatprep.subr.bf16.mxu0 0
      %1910 = vmatpush1.bf16.xpose.msra.mxu0 0
      %1911 = vmatprep.subr.bf16.mxu0 0
      %1912 = vmatpush1.bf16.xpose.msra.mxu0 0
      %1913 = vmatprep.subr.bf16.mxu0 0
      %1914 = vmatpush1.bf16.xpose.msra.mxu0 0
      %1915 = vmatprep.subr.bf16.mxu0 0
      %1916 = vmatpush1.bf16.xpose.msra.mxu0 0
      %1917 = vmatprep.subr.bf16.mxu0 0
      %1918 = vmatpush1.bf16.xpose.msra.mxu0 0
      %1919 = vmatprep.subr.bf16.mxu0 0
      %1920 = vmatpush1.bf16.xpose.msra.mxu0 0
      %1921 = vmatprep.subr.bf16.mxu0 0
      %1922 = vmatpush1.bf16.xpose.msra.mxu0 0
      %1923 = vmatprep.subr.bf16.mxu0 0
      %1924 = vmatpush1.bf16.xpose.msra.mxu0 0
      %1925 = vmatprep.mubr.bf16.mxu0 0
      %1926 = vmatmul.mubr.bf16.gmra.mrb[0].mxu0 %v1879
      %v1927 = vpop.f32.mrb[0].mxu0
      %v1928 = vadd.f32 0.0, %v1927
      %v1929 = vpop.f32.mrb[0].mxu0
      %v1930 = vpop.f32.mrb[0].mxu0
      %v1931 = vadd.f32 0.0, %v1930
      %v1932 = vpop.f32.mrb[0].mxu0
      %1933 = vdwg.mxu0
      %v1934 = vpack.c.bf16 %v1931, %v1928
      %1935 = vrot.lane.b32.xlu0 %v1277, 96
      %v1936 = vpop.permute.xlu0 %1935
      %1937 = vrot.lane.b32.xlu0 %v1278, 96
      %v1938 = vpop.permute.xlu0 %1937
      %1939 = vrot.lane.b32.xlu0 %v1279, 96
      %v1940 = vpop.permute.xlu0 %1939
      %1941 = vrot.lane.b32.xlu0 %v1280, 96
      %v1942 = vpop.permute.xlu0 %1941
      %v1944 = vsel %vm1034, %v1936, 0
      %v1947 = vsel %vm1034, %v1938, 0
      %v1950 = vsel %vm1034, %v1940, 0
      %v1953 = vsel %vm1034, %v1942, 0
      %1955 = vmatprep.subr.bf16.mxu0 0
      %1956 = vmatpush1.bf16.msra.mxu0 %v1934
      %1957 = vmatprep.subr.bf16.mxu0 0
      %1958 = vmatpush1.bf16.msra.mxu0 0
      %1959 = vmatprep.subr.bf16.mxu0 0
      %1960 = vmatpush1.bf16.msra.mxu0 0
      %1961 = vmatprep.subr.bf16.mxu0 0
      %1962 = vmatpush1.bf16.msra.mxu0 0
      %1963 = vmatprep.subr.bf16.mxu0 0
      %1964 = vmatpush1.bf16.msra.mxu0 0
      %1965 = vmatprep.subr.bf16.mxu0 0
      %1966 = vmatpush1.bf16.msra.mxu0 0
      %1967 = vmatprep.subr.bf16.mxu0 0
      %1968 = vmatpush1.bf16.msra.mxu0 0
      %1969 = vmatprep.subr.bf16.mxu0 0
      %1970 = vmatpush1.bf16.msra.mxu0 0
      %1971 = vmatprep.subr.bf16.mxu0 0
      %1972 = vmatpush1.bf16.msra.mxu0 0
      %1973 = vmatprep.subr.bf16.mxu0 0
      %1974 = vmatpush1.bf16.msra.mxu0 0
      %1975 = vmatprep.subr.bf16.mxu0 0
      %1976 = vmatpush1.bf16.msra.mxu0 0
      %1977 = vmatprep.subr.bf16.mxu0 0
      %1978 = vmatpush1.bf16.msra.mxu0 0
      %1979 = vmatprep.subr.bf16.mxu0 0
      %1980 = vmatpush1.bf16.msra.mxu0 0
      %1981 = vmatprep.subr.bf16.mxu0 0
      %1982 = vmatpush1.bf16.msra.mxu0 0
      %1983 = vmatprep.subr.bf16.mxu0 0
      %1984 = vmatpush1.bf16.msra.mxu0 0
      %1985 = vmatprep.subr.bf16.mxu0 0
      %1986 = vmatpush1.bf16.msra.mxu0 0
      %1987 = vmatprep.mubr.bf16.mxu0 0
      %1988 = vmatmul.mubr.bf16.gmra.mrb[0].mxu0 %v1944
      %v1989 = vpop.f32.mrb[0].mxu0
      %v1990 = vadd.f32 0.0, %v1989
      %v1991 = vpop.f32.mrb[0].mxu0
      %v1992 = vpop.f32.mrb[0].mxu0
      %v1993 = vadd.f32 0.0, %v1992
      %v1994 = vpop.f32.mrb[0].mxu0
      %1995 = vmatprep.mubr.bf16.mxu0 0
      %1996 = vmatmul.mubr.bf16.gmra.mrb[0].mxu0 %v1947
      %v1997 = vpop.f32.mrb[0].mxu0
      %v1998 = vadd.f32 0.0, %v1997
      %v1999 = vpop.f32.mrb[0].mxu0
      %v2000 = vpop.f32.mrb[0].mxu0
      %v2001 = vadd.f32 0.0, %v2000
      %v2002 = vpop.f32.mrb[0].mxu0
      %2003 = vmatprep.mubr.bf16.mxu0 0
      %2004 = vmatmul.mubr.bf16.gmra.mrb[0].mxu0 %v1950
      %v2005 = vpop.f32.mrb[0].mxu0
      %v2006 = vadd.f32 0.0, %v2005
      %v2007 = vpop.f32.mrb[0].mxu0
      %v2008 = vpop.f32.mrb[0].mxu0
      %v2009 = vadd.f32 0.0, %v2008
      %v2010 = vpop.f32.mrb[0].mxu0
      %2011 = vmatprep.mubr.bf16.mxu0 0
      %2012 = vmatmul.mubr.bf16.gmra.mrb[0].mxu0 %v1953
      %v2013 = vpop.f32.mrb[0].mxu0
      %v2014 = vadd.f32 0.0, %v2013
      %v2015 = vpop.f32.mrb[0].mxu0
      %v2016 = vpop.f32.mrb[0].mxu0
      %v2017 = vadd.f32 0.0, %v2016
      %v2018 = vpop.f32.mrb[0].mxu0
      %2019 = vdwg.mxu0
      %v2020 = vadd.f32 %v1691, %v1990
      %v2021 = vadd.f32 %v1692, %v1993
      %v2022 = vadd.f32 %v1693, %v1998
      %v2023 = vadd.f32 %v1694, %v2001
      %v2024 = vadd.f32 %v1695, %v2006
      %v2025 = vadd.f32 %v1696, %v2009
      %v2026 = vadd.f32 %v1697, %v2014
      %v2027 = vadd.f32 %v1698, %v2017
      %v2028 = vpack.c.bf16 %v852, %v849
      %v2029 = vpack.c.bf16 %v884, %v881
      %2030 = vrot.lane.b32.xlu0 %v1028, 80
      %v2031 = vpop.permute.xlu0 %2030
      %2032 = vrot.lane.b32.xlu0 %v1029, 80
      %v2033 = vpop.permute.xlu0 %2032
      %2034 = vrot.lane.b32.xlu0 %v1030, 80
      %v2035 = vpop.permute.xlu0 %2034
      %2036 = vrot.lane.b32.xlu0 %v1031, 80
      %v2037 = vpop.permute.xlu0 %2036
      %v2039 = vsel %vm1034, %v2031, 0
      %v2042 = vsel %vm1034, %v2033, 0
      %v2045 = vsel %vm1034, %v2035, 0
      %v2048 = vsel %vm1034, %v2037, 0
      %2050 = vmatprep.subr.bf16.mxu0 0
      %2051 = vmatpush1.bf16.msra.mxu0 %v2028
      %2052 = vmatprep.subr.bf16.mxu0 0
      %2053 = vmatpush1.bf16.msra.mxu0 0
      %2054 = vmatprep.subr.bf16.mxu0 0
      %2055 = vmatpush1.bf16.msra.mxu0 0
      %2056 = vmatprep.subr.bf16.mxu0 0
      %2057 = vmatpush1.bf16.msra.mxu0 0
      %2058 = vmatprep.subr.bf16.mxu0 0
      %2059 = vmatpush1.bf16.msra.mxu0 0
      %2060 = vmatprep.subr.bf16.mxu0 0
      %2061 = vmatpush1.bf16.msra.mxu0 0
      %2062 = vmatprep.subr.bf16.mxu0 0
      %2063 = vmatpush1.bf16.msra.mxu0 0
      %2064 = vmatprep.subr.bf16.mxu0 0
      %2065 = vmatpush1.bf16.msra.mxu0 0
      %2066 = vmatprep.subr.bf16.mxu0 0
      %2067 = vmatpush1.bf16.msra.mxu0 0
      %2068 = vmatprep.subr.bf16.mxu0 0
      %2069 = vmatpush1.bf16.msra.mxu0 0
      %2070 = vmatprep.subr.bf16.mxu0 0
      %2071 = vmatpush1.bf16.msra.mxu0 0
      %2072 = vmatprep.subr.bf16.mxu0 0
      %2073 = vmatpush1.bf16.msra.mxu0 0
      %2074 = vmatprep.subr.bf16.mxu0 0
      %2075 = vmatpush1.bf16.msra.mxu0 0
      %2076 = vmatprep.subr.bf16.mxu0 0
      %2077 = vmatpush1.bf16.msra.mxu0 0
      %2078 = vmatprep.subr.bf16.mxu0 0
      %2079 = vmatpush1.bf16.msra.mxu0 0
      %2080 = vmatprep.subr.bf16.mxu0 0
      %2081 = vmatpush1.bf16.msra.mxu0 0
      %2082 = vmatprep.mubr.bf16.mxu0 0
      %2083 = vmatmul.mubr.bf16.gmra.mrb[0].mxu0 %v2039
      %v2084 = vpop.f32.mrb[0].mxu0
      %v2085 = vadd.f32 0.0, %v2084
      %v2086 = vpop.f32.mrb[0].mxu0
      %v2087 = vpop.f32.mrb[0].mxu0
      %v2088 = vadd.f32 0.0, %v2087
      %v2089 = vpop.f32.mrb[0].mxu0
      %2090 = vmatprep.mubr.bf16.mxu0 0
      %2091 = vmatmul.mubr.bf16.gmra.mrb[0].mxu0 %v2042
      %v2092 = vpop.f32.mrb[0].mxu0
      %v2093 = vadd.f32 0.0, %v2092
      %v2094 = vpop.f32.mrb[0].mxu0
      %v2095 = vpop.f32.mrb[0].mxu0
      %v2096 = vadd.f32 0.0, %v2095
      %v2097 = vpop.f32.mrb[0].mxu0
      %2098 = vmatprep.mubr.bf16.mxu0 0
      %2099 = vmatmul.mubr.bf16.gmra.mrb[0].mxu0 %v2045
      %v2100 = vpop.f32.mrb[0].mxu0
      %v2101 = vadd.f32 0.0, %v2100
      %v2102 = vpop.f32.mrb[0].mxu0
      %v2103 = vpop.f32.mrb[0].mxu0
      %v2104 = vadd.f32 0.0, %v2103
      %v2105 = vpop.f32.mrb[0].mxu0
      %2106 = vmatprep.mubr.bf16.mxu0 0
      %2107 = vmatmul.mubr.bf16.gmra.mrb[0].mxu0 %v2048
      %v2108 = vpop.f32.mrb[0].mxu0
      %v2109 = vadd.f32 0.0, %v2108
      %v2110 = vpop.f32.mrb[0].mxu0
      %v2111 = vpop.f32.mrb[0].mxu0
      %v2112 = vadd.f32 0.0, %v2111
      %v2113 = vpop.f32.mrb[0].mxu0
      %2114 = vdwg.mxu0
      %v2115 = vsel %vm337, %v2085, -inf
      %2116 = vmax.xlane.f32.xlu0 %v2115
      %v2117 = vpop.xlane.xlu0 %2116
      %v2118 = vsel %vm337, %v2088, -inf
      %2119 = vmax.xlane.f32.xlu0 %v2118
      %v2120 = vpop.xlane.xlu0 %2119
      %v2121 = vsel %vm337, %v2093, -inf
      %2122 = vmax.xlane.f32.xlu0 %v2121
      %v2123 = vpop.xlane.xlu0 %2122
      %v2124 = vsel %vm337, %v2096, -inf
      %2125 = vmax.xlane.f32.xlu0 %v2124
      %v2126 = vpop.xlane.xlu0 %2125
      %v2127 = vsel %vm337, %v2101, -inf
      %2128 = vmax.xlane.f32.xlu0 %v2127
      %v2129 = vpop.xlane.xlu0 %2128
      %v2130 = vsel %vm337, %v2104, -inf
      %2131 = vmax.xlane.f32.xlu0 %v2130
      %v2132 = vpop.xlane.xlu0 %2131
      %v2133 = vsel %vm337, %v2109, -inf
      %2134 = vmax.xlane.f32.xlu0 %v2133
      %v2135 = vpop.xlane.xlu0 %2134
      %v2136 = vsel %vm337, %v2112, -inf
      %2137 = vmax.xlane.f32.xlu0 %v2136
      %v2138 = vpop.xlane.xlu0 %2137
      %v2139 = vsub.f32 %v2085, %v2117
      %v2140 = vsub.f32 %v2088, %v2120
      %v2141 = vsub.f32 %v2093, %v2123
      %v2142 = vsub.f32 %v2096, %v2126
      %v2143 = vsub.f32 %v2101, %v2129
      %v2144 = vsub.f32 %v2104, %v2132
      %v2145 = vsub.f32 %v2109, %v2135
      %v2146 = vsub.f32 %v2112, %v2138
      %v2147 = vmul.f32 %v2139, 1.442695
      %v2148 = vpow.pop %v2147
      %v2149 = vmul.f32 %v2140, 1.442695
      %v2150 = vpow.pop %v2149
      %v2151 = vmul.f32 %v2141, 1.442695
      %v2152 = vpow.pop %v2151
      %v2153 = vmul.f32 %v2142, 1.442695
      %v2154 = vpow.pop %v2153
      %v2155 = vmul.f32 %v2143, 1.442695
      %v2156 = vpow.pop %v2155
      %v2157 = vmul.f32 %v2144, 1.442695
      %v2158 = vpow.pop %v2157
      %v2159 = vmul.f32 %v2145, 1.442695
      %v2160 = vpow.pop %v2159
      %v2161 = vmul.f32 %v2146, 1.442695
      %v2162 = vpow.pop %v2161
      %v2163 = vsel %vm337, %v2148, 0.0
      %2164 = vadd.xlane.f32.xlu0 %v2163
      %v2165 = vpop.xlane.xlu0 %2164
      %v2166 = vsel %vm337, %v2150, 0.0
      %2167 = vadd.xlane.f32.xlu0 %v2166
      %v2168 = vpop.xlane.xlu0 %2167
      %v2169 = vsel %vm337, %v2152, 0.0
      %2170 = vadd.xlane.f32.xlu0 %v2169
      %v2171 = vpop.xlane.xlu0 %2170
      %v2172 = vsel %vm337, %v2154, 0.0
      %2173 = vadd.xlane.f32.xlu0 %v2172
      %v2174 = vpop.xlane.xlu0 %2173
      %v2175 = vsel %vm337, %v2156, 0.0
      %2176 = vadd.xlane.f32.xlu0 %v2175
      %v2177 = vpop.xlane.xlu0 %2176
      %v2178 = vsel %vm337, %v2158, 0.0
      %2179 = vadd.xlane.f32.xlu0 %v2178
      %v2180 = vpop.xlane.xlu0 %2179
      %v2181 = vsel %vm337, %v2160, 0.0
      %2182 = vadd.xlane.f32.xlu0 %v2181
      %v2183 = vpop.xlane.xlu0 %2182
      %v2184 = vsel %vm337, %v2162, 0.0
      %2185 = vadd.xlane.f32.xlu0 %v2184
      %v2186 = vpop.xlane.xlu0 %2185
      %v2187 = vrcp.pop %v2165
      %v2188 = vrcp.pop %v2168
      %v2189 = vrcp.pop %v2171
      %v2190 = vrcp.pop %v2174
      %v2191 = vrcp.pop %v2177
      %v2192 = vrcp.pop %v2180
      %v2193 = vrcp.pop %v2183
      %v2194 = vrcp.pop %v2186
      %v2195 = vmul.f32 %v2148, %v2187
      %v2196 = vmul.f32 %v2150, %v2188
      %v2197 = vmul.f32 %v2152, %v2189
      %v2198 = vmul.f32 %v2154, %v2190
      %v2199 = vmul.f32 %v2156, %v2191
      %v2200 = vmul.f32 %v2158, %v2192
      %v2201 = vmul.f32 %v2160, %v2193
      %v2202 = vmul.f32 %v2162, %v2194
      %v2203 = vpack.c.bf16 %v2196, %v2195
      %v2204 = vpack.c.bf16 %v2198, %v2197
      %v2205 = vpack.c.bf16 %v2200, %v2199
      %v2206 = vpack.c.bf16 %v2202, %v2201
      %v2208 = vsel %vm337, %v2029, 0
      %v2211 = vsel %vm337, %v2203, 0
      %v2214 = vsel %vm337, %v2204, 0
      %v2217 = vsel %vm337, %v2205, 0
      %v2220 = vsel %vm337, %v2206, 0
      %2222 = vmatprep.subr.bf16.mxu0 0
      %2223 = vmatpush1.bf16.xpose.msra.mxu0 %v2211
      %2224 = vmatprep.subr.bf16.mxu0 0
      %2225 = vmatpush1.bf16.xpose.msra.mxu0 %v2214
      %2226 = vmatprep.subr.bf16.mxu0 0
      %2227 = vmatpush1.bf16.xpose.msra.mxu0 %v2217
      %2228 = vmatprep.subr.bf16.mxu0 0
      %2229 = vmatpush1.bf16.xpose.msra.mxu0 %v2220
      %2230 = vmatprep.subr.bf16.mxu0 0
      %2231 = vmatpush1.bf16.xpose.msra.mxu0 0
      %2232 = vmatprep.subr.bf16.mxu0 0
      %2233 = vmatpush1.bf16.xpose.msra.mxu0 0
      %2234 = vmatprep.subr.bf16.mxu0 0
      %2235 = vmatpush1.bf16.xpose.msra.mxu0 0
      %2236 = vmatprep.subr.bf16.mxu0 0
      %2237 = vmatpush1.bf16.xpose.msra.mxu0 0
      %2238 = vmatprep.subr.bf16.mxu0 0
      %2239 = vmatpush1.bf16.xpose.msra.mxu0 0
      %2240 = vmatprep.subr.bf16.mxu0 0
      %2241 = vmatpush1.bf16.xpose.msra.mxu0 0
      %2242 = vmatprep.subr.bf16.mxu0 0
      %2243 = vmatpush1.bf16.xpose.msra.mxu0 0
      %2244 = vmatprep.subr.bf16.mxu0 0
      %2245 = vmatpush1.bf16.xpose.msra.mxu0 0
      %2246 = vmatprep.subr.bf16.mxu0 0
      %2247 = vmatpush1.bf16.xpose.msra.mxu0 0
      %2248 = vmatprep.subr.bf16.mxu0 0
      %2249 = vmatpush1.bf16.xpose.msra.mxu0 0
      %2250 = vmatprep.subr.bf16.mxu0 0
      %2251 = vmatpush1.bf16.xpose.msra.mxu0 0
      %2252 = vmatprep.subr.bf16.mxu0 0
      %2253 = vmatpush1.bf16.xpose.msra.mxu0 0
      %2254 = vmatprep.mubr.bf16.mxu0 0
      %2255 = vmatmul.mubr.bf16.gmra.mrb[0].mxu0 %v2208
      %v2256 = vpop.f32.mrb[0].mxu0
      %v2257 = vadd.f32 0.0, %v2256
      %v2258 = vpop.f32.mrb[0].mxu0
      %v2259 = vpop.f32.mrb[0].mxu0
      %v2260 = vadd.f32 0.0, %v2259
      %v2261 = vpop.f32.mrb[0].mxu0
      %2262 = vdwg.mxu0
      %v2263 = vpack.c.bf16 %v2260, %v2257
      %2264 = vrot.lane.b32.xlu0 %v1277, 80
      %v2265 = vpop.permute.xlu0 %2264
      %2266 = vrot.lane.b32.xlu0 %v1278, 80
      %v2267 = vpop.permute.xlu0 %2266
      %2268 = vrot.lane.b32.xlu0 %v1279, 80
      %v2269 = vpop.permute.xlu0 %2268
      %2270 = vrot.lane.b32.xlu0 %v1280, 80
      %v2271 = vpop.permute.xlu0 %2270
      %v2273 = vsel %vm1034, %v2265, 0
      %v2276 = vsel %vm1034, %v2267, 0
      %v2279 = vsel %vm1034, %v2269, 0
      %v2282 = vsel %vm1034, %v2271, 0
      %2284 = vmatprep.subr.bf16.mxu0 0
      %2285 = vmatpush1.bf16.msra.mxu0 %v2263
      %2286 = vmatprep.subr.bf16.mxu0 0
      %2287 = vmatpush1.bf16.msra.mxu0 0
      %2288 = vmatprep.subr.bf16.mxu0 0
      %2289 = vmatpush1.bf16.msra.mxu0 0
      %2290 = vmatprep.subr.bf16.mxu0 0
      %2291 = vmatpush1.bf16.msra.mxu0 0
      %2292 = vmatprep.subr.bf16.mxu0 0
      %2293 = vmatpush1.bf16.msra.mxu0 0
      %2294 = vmatprep.subr.bf16.mxu0 0
      %2295 = vmatpush1.bf16.msra.mxu0 0
      %2296 = vmatprep.subr.bf16.mxu0 0
      %2297 = vmatpush1.bf16.msra.mxu0 0
      %2298 = vmatprep.subr.bf16.mxu0 0
      %2299 = vmatpush1.bf16.msra.mxu0 0
      %2300 = vmatprep.subr.bf16.mxu0 0
      %2301 = vmatpush1.bf16.msra.mxu0 0
      %2302 = vmatprep.subr.bf16.mxu0 0
      %2303 = vmatpush1.bf16.msra.mxu0 0
      %2304 = vmatprep.subr.bf16.mxu0 0
      %2305 = vmatpush1.bf16.msra.mxu0 0
      %2306 = vmatprep.subr.bf16.mxu0 0
      %2307 = vmatpush1.bf16.msra.mxu0 0
      %2308 = vmatprep.subr.bf16.mxu0 0
      %2309 = vmatpush1.bf16.msra.mxu0 0
      %2310 = vmatprep.subr.bf16.mxu0 0
      %2311 = vmatpush1.bf16.msra.mxu0 0
      %2312 = vmatprep.subr.bf16.mxu0 0
      %2313 = vmatpush1.bf16.msra.mxu0 0
      %2314 = vmatprep.subr.bf16.mxu0 0
      %2315 = vmatpush1.bf16.msra.mxu0 0
      %2316 = vmatprep.mubr.bf16.mxu0 0
      %2317 = vmatmul.mubr.bf16.gmra.mrb[0].mxu0 %v2273
      %v2318 = vpop.f32.mrb[0].mxu0
      %v2319 = vadd.f32 0.0, %v2318
      %v2320 = vpop.f32.mrb[0].mxu0
      %v2321 = vpop.f32.mrb[0].mxu0
      %v2322 = vadd.f32 0.0, %v2321
      %v2323 = vpop.f32.mrb[0].mxu0
      %2324 = vmatprep.mubr.bf16.mxu0 0
      %2325 = vmatmul.mubr.bf16.gmra.mrb[0].mxu0 %v2276
      %v2326 = vpop.f32.mrb[0].mxu0
      %v2327 = vadd.f32 0.0, %v2326
      %v2328 = vpop.f32.mrb[0].mxu0
      %v2329 = vpop.f32.mrb[0].mxu0
      %v2330 = vadd.f32 0.0, %v2329
      %v2331 = vpop.f32.mrb[0].mxu0
      %2332 = vmatprep.mubr.bf16.mxu0 0
      %2333 = vmatmul.mubr.bf16.gmra.mrb[0].mxu0 %v2279
      %v2334 = vpop.f32.mrb[0].mxu0
      %v2335 = vadd.f32 0.0, %v2334
      %v2336 = vpop.f32.mrb[0].mxu0
      %v2337 = vpop.f32.mrb[0].mxu0
      %v2338 = vadd.f32 0.0, %v2337
      %v2339 = vpop.f32.mrb[0].mxu0
      %2340 = vmatprep.mubr.bf16.mxu0 0
      %2341 = vmatmul.mubr.bf16.gmra.mrb[0].mxu0 %v2282
      %v2342 = vpop.f32.mrb[0].mxu0
      %v2343 = vadd.f32 0.0, %v2342
      %v2344 = vpop.f32.mrb[0].mxu0
      %v2345 = vpop.f32.mrb[0].mxu0
      %v2346 = vadd.f32 0.0, %v2345
      %v2347 = vpop.f32.mrb[0].mxu0
      %2348 = vdwg.mxu0
      %v2349 = vadd.f32 %v2020, %v2319
      %v2350 = vadd.f32 %v2021, %v2322
      %v2351 = vadd.f32 %v2022, %v2327
      %v2352 = vadd.f32 %v2023, %v2330
      %v2353 = vadd.f32 %v2024, %v2335
      %v2354 = vadd.f32 %v2025, %v2338
      %v2355 = vadd.f32 %v2026, %v2343
      %v2356 = vadd.f32 %v2027, %v2346
      %2357 = vst.msk [vmem:[%s224] sm:$0xff] %vm337, %v2349
      %2358 = vst.msk [vmem:[%s224 + $0x8] sm:$0xff] %vm337, %v2350
      %2359 = vst.msk [vmem:[%s224 + $0x10] sm:$0xff] %vm337, %v2351
      %2360 = vst.msk [vmem:[%s224 + $0x18] sm:$0xff] %vm337, %v2352
      %2361 = vst.msk [vmem:[%s224 + $0x20] sm:$0xff] %vm337, %v2353
      %2362 = vst.msk [vmem:[%s224 + $0x28] sm:$0xff] %vm337, %v2354
      %2363 = vst.msk [vmem:[%s224 + $0x30] sm:$0xff] %vm337, %v2355
      %2364 = vst.msk [vmem:[%s224 + $0x38] sm:$0xff] %vm337, %v2356
      %p2365 = scmp.lt.s32.totalorder %s16, 1
      %s2366 = scalar_select %p2365, %s16, 1
      %s2367 = smul.addr %s2366, 8
      %s2368 = smul.addr %s2367, 8
      %s2369 = scalar_lea.vmem %s5, %s2368
      // Predicated region
      $region41: #{attention_block_forward.1} parent=39 // pred_check
        %p2370 = pneg %p144
      $region42: #{attention_block_forward.1} parent=39 // pred_check_branch
        %2372 = sbr.rel (%p2370) target = $region44
      $region43: #{attention_block_forward.1} parent=39 // pred_region
        _
      $region44: #{attention_block_forward.1} parent=39 // pred_fallthru
        _
    $region40: #{attention_block_forward.1} parent=5 // pred_fallthru
      _
    %p2373 = scmp.le.s32.totalorder 2, %s11
    // Predicated region
    $region45: #{attention_block_forward.1} parent=5 // pred_check
      %p2374 = pneg %p2373
    $region46: #{attention_block_forward.1} parent=5 // pred_check_branch
      %2376 = sbr.rel (%p2374) target = $region48
    $region47: #{attention_block_forward.1} parent=5 // pred_region
      %s2377 = ssub.s32 %s11, 2
      // Predicated region
      $region49: #{attention_block_forward.1} parent=47 // pred_check
        %p2378 = pneg %p150
      $region50: #{attention_block_forward.1} parent=47 // pred_check_branch
        %2380 = sbr.rel (%p2378) target = $region52
      $region51: #{attention_block_forward.1} parent=47 // pred_region
        %p2381 = scmp.lt.s32.totalorder %s17, 1
        %s2382 = scalar_select %p2381, %s17, 1
        %s2383 = smul.addr %s2382, 8
        %s2384 = smul.addr %s2383, 8
        %s2385 = scalar_lea.vmem %s5, %s2384
      $region52: #{attention_block_forward.1} parent=47 // pred_fallthru
        _
    $region48: #{attention_block_forward.1} parent=5 // pred_fallthru
      _
  $region6: #{attention_block_forward.1} parent=0 // loop_footer
    %s15 = sadd.s32 1, %s11
  $region7: #{attention_block_forward.1} parent=0 // loop_footer_branch
    %10 = sbr.rel target = $region3
  $region8: #{attention_block_forward.1} parent=0 // loop_exit
    _

</llo_original>
